<compile_context>
chip_gen: v7x
topology: tpu7x:2x2x1
jax: 0.10.0
libtpu: 0.0.40
codegen_flags: <defaults>
</compile_context>

<pallas_src>
import functools

import jax
import jax.numpy as jnp
from jax.experimental import pallas as pl
from jax.experimental.pallas import tpu as pltpu


LANE = 128  # lane width: every feature axis is zero-padded to this.


# ------------------------------ fused kernel --------------------------------

def _fused_kernel(n_layers, h_clf,
                  x_ref, a1_ref, a2_ref, w_gnn_ref, w_sq_ref, w_pair_ref,
                  b_ref, pc_out_ref, ks_out_ref):
    """Entire PitchSpellingGNN forward (add_seq=False, inference) in one body."""
    f32, bf16 = jnp.float32, jnp.bfloat16

    # Static slot layout of the stacked bias / norm-parameter operand.
    B_ENC1, B_ENC2 = n_layers, n_layers + 1
    B_GN_G, B_GN_B, B_GN_A = n_layers + 2, n_layers + 3, n_layers + 4
    B_PC1, B_KS1 = n_layers + 5, n_layers + 6
    B_PC_LNG, B_PC_LNB, B_PC2 = n_layers + 7, n_layers + 8, n_layers + 9
    B_KS_LNG, B_KS_LNB, B_KS2 = n_layers + 10, n_layers + 11, n_layers + 12
    # Static slot layout of the square (128x128) weight stack.
    W_ENC1, W_ENC2, W_KS1B, W_PC2, W_KS2 = 0, 1, 2, 3, 4

    a1 = a1_ref[...]                 # bf16 (N, N) row-normalized adjacency
    a2 = a2_ref[...]
    h = x_ref[...]                   # f32 (N, 128) zero-padded node features

    # ---- MetricalGNN: n_layers x (HeteroConv{2 x mean-SAGEConv}, 'mean') + ReLU.
    # SAGEConv(mean): out = mean_j(x_j) @ Wl + bl + x_i @ Wr.  The 0.5
    # relation-mean is folded into the stacked weight; per layer there is ONE
    # weight matmul with K = 3*128 = 384 (feeds the 256-wide MXU on v6e/v7x).
    for l in range(n_layers):
        hb = h.astype(bf16)
        agg1 = jnp.dot(a1, hb, preferred_element_type=f32)        # (N, 128)
        agg2 = jnp.dot(a2, hb, preferred_element_type=f32)        # (N, 128)
        cat = jnp.concatenate(
            [agg1.astype(bf16), agg2.astype(bf16), hb], axis=-1)  # (N, 384)
        m = jnp.dot(cat, w_gnn_ref[l], preferred_element_type=f32) + b_ref[l]
        h = jnp.maximum(m, 0.0)

    # ---- Encoder projection: Linear -> ReLU -> (Dropout=id) -> Linear.
    e = jnp.maximum(
        jnp.dot(h.astype(bf16), w_sq_ref[W_ENC1], preferred_element_type=f32)
        + b_ref[B_ENC1], 0.0)
    x_enc = (jnp.dot(e.astype(bf16), w_sq_ref[W_ENC2], preferred_element_type=f32)
             + b_ref[B_ENC2])

    # ---- GraphNorm (batch=None: stats over the node axis), f32 math.
    mean = jnp.mean(x_enc, axis=0, keepdims=True)
    cen = x_enc - b_ref[B_GN_A] * mean
    var = jnp.mean(cen * cen, axis=0, keepdims=True)
    x_n = b_ref[B_GN_G] * cen * jax.lax.rsqrt(var + 1e-5) + b_ref[B_GN_B]
    x_nb = x_n.astype(bf16)

    # ---- Classifier heads: Linear -> ReLU -> LayerNorm -> (Dropout=id) -> Linear.
    # Hidden axis is zero-padded to 128 lanes; LayerNorm stats are restricted
    # to the first h_clf real lanes with a static mask.
    lane_id = jax.lax.broadcasted_iota(jnp.int32, (1, LANE), 1)
    clf_mask = (lane_id < h_clf).astype(f32)
    inv_h = 1.0 / float(h_clf)

    def clf_tail(pre, g, bt, w2, b2):
        hc = jnp.maximum(pre, 0.0)                 # padded lanes stay exactly 0
        mu = jnp.sum(hc, axis=-1, keepdims=True) * inv_h
        c = (hc - mu) * clf_mask
        var_c = jnp.sum(c * c, axis=-1, keepdims=True) * inv_h
        hn = c * jax.lax.rsqrt(var_c + 1e-5) * g + bt
        return jnp.dot(hn.astype(bf16), w2, preferred_element_type=f32) + b2

    # First head layers paired into one (N,128)@(128,256) matmul: [pc_w1|ks_w1a].
    pair = jnp.dot(x_nb, w_pair_ref[...], preferred_element_type=f32)  # (N, 256)
    pc_pre = pair[:, :LANE] + b_ref[B_PC1]
    pc_logits = clf_tail(pc_pre, b_ref[B_PC_LNG], b_ref[B_PC_LNB],
                         w_sq_ref[W_PC2], b_ref[B_PC2])
    pc_out_ref[...] = pc_logits                    # lane-dense (N, 128) store

    # ks head consumes cat([x, out_pc], -1) -> split-weight matmul (no concat).
    ks_pre = (pair[:, LANE:]
              + jnp.dot(pc_logits.astype(bf16), w_sq_ref[W_KS1B],
                        preferred_element_type=f32)
              + b_ref[B_KS1])
    ks_out_ref[...] = clf_tail(ks_pre, b_ref[B_KS_LNG], b_ref[B_KS_LNB],
                               w_sq_ref[W_KS2], b_ref[B_KS2])


# ------------------------------ parameters ----------------------------------

def _linear_init(key, fan_in, fan_out):
    k1, k2 = jax.random.split(key)
    lim = 1.0 / jnp.sqrt(jnp.float32(fan_in))
    w = jax.random.uniform(k1, (fan_in, fan_out), jnp.float32, -lim, lim)
    b = jax.random.uniform(k2, (1, fan_out), jnp.float32, -lim, lim)
    return w, b


def init_params(key, in_feats, n_hidden, out_enc, out_pc, out_ks, n_layers):
    """PyTorch-shaped (unpadded) parameters, matching the module layout."""
    keys = iter(jax.random.split(key, 64))
    params = {"gnn_layers": []}
    for layer in range(n_layers):
        fi = in_feats if layer == 0 else n_hidden
        wl1, bl1 = _linear_init(next(keys), fi, n_hidden)
        wr1, _ = _linear_init(next(keys), fi, n_hidden)   # SAGEConv lin_r: no bias
        wl2, bl2 = _linear_init(next(keys), fi, n_hidden)
        wr2, _ = _linear_init(next(keys), fi, n_hidden)
        params["gnn_layers"].append(dict(wl1=wl1, bl1=bl1, wr1=wr1,
                                         wl2=wl2, bl2=bl2, wr2=wr2))
    params["enc_w1"], params["enc_b1"] = _linear_init(next(keys), n_hidden, n_hidden)
    params["enc_w2"], params["enc_b2"] = _linear_init(next(keys), n_hidden, out_enc)
    params["gn_gamma"] = jnp.ones((1, out_enc), jnp.float32)
    params["gn_beta"] = jnp.zeros((1, out_enc), jnp.float32)
    params["gn_alpha"] = jnp.ones((1, out_enc), jnp.float32)
    h = out_enc // 2
    params["pc_w1"], params["pc_b1"] = _linear_init(next(keys), out_enc, h)
    params["pc_ln_g"] = jnp.ones((1, h), jnp.float32)
    params["pc_ln_b"] = jnp.zeros((1, h), jnp.float32)
    params["pc_w2"], params["pc_b2"] = _linear_init(next(keys), h, out_pc)
    params["ks_w1"], params["ks_b1"] = _linear_init(next(keys), out_enc + out_pc, h)
    params["ks_ln_g"] = jnp.ones((1, h), jnp.float32)
    params["ks_ln_b"] = jnp.zeros((1, h), jnp.float32)
    params["ks_w2"], params["ks_b2"] = _linear_init(next(keys), h, out_ks)
    return params


def _pad_row(row):
    row = row.reshape(1, -1)
    return jnp.zeros((1, LANE), jnp.float32).at[:, :row.shape[1]].set(row)


def _pad_sq(w):
    return jnp.zeros((LANE, LANE), jnp.float32).at[:w.shape[0], :w.shape[1]].set(w)


def prepare_fused_params(params, in_feats, n_hidden, out_enc, out_pc, out_ks):
    """One-time weight prep: merge relations + fold root term + fold the 0.5
    relation-mean, pad to 128 lanes, stack everything into FOUR operands
    (matmul weights bf16; biases / norm params f32)."""
    bf16 = jnp.bfloat16
    n_layers = len(params["gnn_layers"])
    h_clf = out_enc // 2
    assert max(in_feats, n_hidden, out_enc, out_pc, out_ks, h_clf) <= LANE

    # GNN layer stack: [0.5*Wl1 ; 0.5*Wl2 ; 0.5*(Wr1+Wr2)]  (n_layers, 384, 128)
    w_gnn = jnp.zeros((n_layers, 3 * LANE, LANE), jnp.float32)
    b_rows = []
    fi = in_feats
    for l, lyr in enumerate(params["gnn_layers"]):
        w_gnn = w_gnn.at[l, :fi, :n_hidden].set(0.5 * lyr["wl1"])
        w_gnn = w_gnn.at[l, LANE:LANE + fi, :n_hidden].set(0.5 * lyr["wl2"])
        w_gnn = w_gnn.at[l, 2 * LANE:2 * LANE + fi, :n_hidden].set(
            0.5 * (lyr["wr1"] + lyr["wr2"]))
        b_rows.append(_pad_row(0.5 * (lyr["bl1"] + lyr["bl2"])))
        fi = n_hidden

    # Square (128x128) weight stack: enc_w1, enc_w2, ks_w1b, pc_w2, ks_w2.
    w_sq = jnp.stack([_pad_sq(params["enc_w1"]),
                      _pad_sq(params["enc_w2"]),
                      _pad_sq(params["ks_w1"][out_enc:]),   # consumes pc logits
                      _pad_sq(params["pc_w2"]),
                      _pad_sq(params["ks_w2"])])

    # Paired first-head weight [pc_w1 | ks_w1a] -> one (128, 256) matmul.
    w_pair = jnp.zeros((LANE, 2 * LANE), jnp.float32)
    w_pair = w_pair.at[:out_enc, :h_clf].set(params["pc_w1"])
    w_pair = w_pair.at[:out_enc, LANE:LANE + h_clf].set(params["ks_w1"][:out_enc])

    # Bias / norm-parameter stack (order must match _fused_kernel slot layout).
    b_rows += [_pad_row(params[k]) for k in
               ("enc_b1", "enc_b2", "gn_gamma", "gn_beta", "gn_alpha",
                "pc_b1", "ks_b1", "pc_ln_g", "pc_ln_b", "pc_b2",
                "ks_ln_g", "ks_ln_b", "ks_b2")]
    b_stack = jnp.stack(b_rows)                      # (n_layers + 13, 1, 128)

    return dict(w_gnn=w_gnn.astype(bf16), w_sq=w_sq.astype(bf16),
                w_pair=w_pair.astype(bf16), b_stack=b_stack,
                n_layers=n_layers, h_clf=h_clf, out_pc=out_pc, out_ks=out_ks)


def prepare_inputs(x_dict, adj_dict):
    """One-time per-graph input prep (lane-pad x, cast adjacencies to bf16) —
    hoisted out of the per-call forward path."""
    x = x_dict["note"]
    n = x.shape[0]
    x_pad = jnp.zeros((n, LANE), jnp.float32).at[:, :x.shape[1]].set(x)
    a1 = adj_dict[("note", "onset", "note")].astype(jnp.bfloat16)
    a2 = adj_dict[("note", "consecutive", "note")].astype(jnp.bfloat16)
    return x_pad, a1, a2


# ------------------------------ forward pass ---------------------------------

def pitch_spelling_gnn_forward(fused, x_pad, a1, a2):
    """Forward for add_seq=False, batch=None, no neighbor masks."""
    n = x_pad.shape[0]
    n_layers, h_clf = fused["n_layers"], fused["h_clf"]

    operands = [x_pad, a1, a2,
                fused["w_gnn"], fused["w_sq"], fused["w_pair"], fused["b_stack"]]

    vmem_spec = pl.BlockSpec(memory_space=pltpu.MemorySpace.VMEM)

    # VMEM budget: operands + outputs + resident activation slack, capped at
    # 64 MiB so the same setting is safe on v7x (and well under 128 MiB on
    # v5e/v6e).
    operand_bytes = sum(int(o.size) * o.dtype.itemsize for o in operands)
    out_bytes = 2 * n * LANE * 4
    act_bytes = 12 * n * LANE * 4
    vmem_limit = int(min(max(2 * (operand_bytes + out_bytes + act_bytes),
                             32 * 2 ** 20),
                         64 * 2 ** 20))

    # Advisory cost for XLA scheduling around the fused custom call.
    flops = (n_layers * (2 * 2 * n * n * LANE          # two adjacency matmuls
                         + 2 * n * (3 * LANE) * LANE)  # fused layer matmul
             + 2 * 2 * n * LANE * LANE                 # encoder matmuls
             + 2 * n * LANE * (2 * LANE)               # paired head matmul
             + 3 * 2 * n * LANE * LANE                 # ks_w1b, pc_w2, ks_w2
             + 40 * n * LANE)                          # elementwise / norms
    bytes_accessed = int(operand_bytes + out_bytes)

    out_pc_pad, out_ks_pad = pl.pallas_call(
        functools.partial(_fused_kernel, n_layers, h_clf),
        out_shape=(jax.ShapeDtypeStruct((n, LANE), jnp.float32),
                   jax.ShapeDtypeStruct((n, LANE), jnp.float32)),
        in_specs=[vmem_spec] * len(operands),
        out_specs=(vmem_spec, vmem_spec),
        compiler_params=pltpu.CompilerParams(vmem_limit_bytes=vmem_limit),
        cost_estimate=pl.CostEstimate(flops=int(flops),
                                      transcendentals=int(2 * n + LANE),
                                      bytes_accessed=bytes_accessed),
    )(*operands)

    # Slice off the zero-padded logit columns (keeps downstream softmax/argmax
    # correct).
    return out_pc_pad[:, :fused["out_pc"]], out_ks_pad[:, :fused["out_ks"]]


# --------------------------------- main --------------------------------------

def _dense_mean_adj(src, dst, n):
    """Row-normalized dense adjacency == PyG SAGEConv mean aggregation."""
    a = jnp.zeros((n, n), jnp.float32).at[dst, src].add(1.0)
    deg = jnp.clip(jnp.sum(a, axis=1, keepdims=True), 1.0, None)
    return a / deg


if __name__ == "__main__":
    IN_FEATS, N_HIDDEN = 16, 32
    OUT_ENC, OUT_PC, OUT_KS = 32, 35, 15
    N_LAYERS = 2
    N_NODES, N_EDGES = 64, 256

    root = jax.random.PRNGKey(0)
    k_param, k_x, k_e1s, k_e1d, k_e2s, k_e2d = jax.random.split(root, 6)

    params = init_params(k_param, IN_FEATS, N_HIDDEN, OUT_ENC, OUT_PC, OUT_KS,
                         N_LAYERS)
    fused = prepare_fused_params(params, IN_FEATS, N_HIDDEN, OUT_ENC, OUT_PC,
                                 OUT_KS)

    x_note = jax.random.normal(k_x, (N_NODES, IN_FEATS), jnp.float32)
    e1 = (jax.random.randint(k_e1s, (N_EDGES,), 0, N_NODES),
          jax.random.randint(k_e1d, (N_EDGES,), 0, N_NODES))
    e2 = (jax.random.randint(k_e2s, (N_EDGES,), 0, N_NODES),
          jax.random.randint(k_e2d, (N_EDGES,), 0, N_NODES))

    x_dict = {"note": x_note}
    adj_dict = {
        ("note", "onset", "note"): _dense_mean_adj(e1[0], e1[1], N_NODES),
        ("note", "consecutive", "note"): _dense_mean_adj(e2[0], e2[1], N_NODES),
    }

    x_pad, a1_bf16, a2_bf16 = prepare_inputs(x_dict, adj_dict)
    out_pc, out_ks = pitch_spelling_gnn_forward(fused, x_pad, a1_bf16, a2_bf16)
    jax.block_until_ready((out_pc, out_ks))
    assert out_pc.shape == (N_NODES, OUT_PC) and out_ks.shape == (N_NODES, OUT_KS)
    assert bool(jnp.all(jnp.isfinite(out_pc))) and bool(jnp.all(jnp.isfinite(out_ks)))
    print("KERNEL_OK")
</pallas_src>

<mosaic_0001>
module attributes {stable_mosaic.version = 11 : i64} {
  func.func @_fused_kernel(%arg0: memref<64x128xf32, #tpu.memory_space<vmem>>, %arg1: memref<64x64xbf16, #tpu.memory_space<vmem>>, %arg2: memref<64x64xbf16, #tpu.memory_space<vmem>>, %arg3: memref<2x384x128xbf16, #tpu.memory_space<vmem>>, %arg4: memref<5x128x128xbf16, #tpu.memory_space<vmem>>, %arg5: memref<128x256xbf16, #tpu.memory_space<vmem>>, %arg6: memref<15x1x128xf32, #tpu.memory_space<vmem>>, %arg7: memref<64x128xf32, #tpu.memory_space<vmem>>, %arg8: memref<64x128xf32, #tpu.memory_space<vmem>>) attributes {dimension_semantics = [], scalar_prefetch = 0 : i64, scratch_operands = 0 : i64, tpu.core_type = #tpu.core_type<tc>} {
    %c0 = arith.constant 0 : index
    %c0_0 = arith.constant 0 : index
    %0 = vector.load %arg1[%c0, %c0_0] : memref<64x64xbf16, #tpu.memory_space<vmem>>, vector<64x64xbf16>
    %c0_1 = arith.constant 0 : index
    %c0_2 = arith.constant 0 : index
    %1 = vector.load %arg2[%c0_1, %c0_2] : memref<64x64xbf16, #tpu.memory_space<vmem>>, vector<64x64xbf16>
    %c0_3 = arith.constant 0 : index
    %c0_4 = arith.constant 0 : index
    %2 = vector.load %arg0[%c0_3, %c0_4] : memref<64x128xf32, #tpu.memory_space<vmem>>, vector<64x128xf32>
    %3 = arith.truncf %2 : vector<64x128xf32> to vector<64x128xbf16>
    %cst = arith.constant dense<0.000000e+00> : vector<64x128xf32>
    %4 = tpu.matmul %0, %3, %cst {dimension_numbers = #tpu.dot_dimension_numbers<[1], [0], [0], [1], [0, 0, 1, 1], [], []>} : vector<64x64xbf16>, vector<64x128xbf16>, vector<64x128xf32> -> vector<64x128xf32>
    %cst_5 = arith.constant dense<0.000000e+00> : vector<64x128xf32>
    %5 = tpu.matmul %1, %3, %cst_5 {dimension_numbers = #tpu.dot_dimension_numbers<[1], [0], [0], [1], [0, 0, 1, 1], [], []>} : vector<64x64xbf16>, vector<64x128xbf16>, vector<64x128xf32> -> vector<64x128xf32>
    %6 = arith.truncf %4 : vector<64x128xf32> to vector<64x128xbf16>
    %7 = arith.truncf %5 : vector<64x128xf32> to vector<64x128xbf16>
    %8 = tpu.concatenate %6, %7, %3 in 1 : vector<64x128xbf16>, vector<64x128xbf16>, vector<64x128xbf16> -> vector<64x384xbf16>
    %c0_6 = arith.constant 0 : index
    %c0_7 = arith.constant 0 : index
    %c0_8 = arith.constant 0 : index
    %9 = vector.load %arg3[%c0_6, %c0_7, %c0_8] : memref<2x384x128xbf16, #tpu.memory_space<vmem>>, vector<1x384x128xbf16>
    %10 = vector.shape_cast %9 : vector<1x384x128xbf16> to vector<384x128xbf16>
    %cst_9 = arith.constant dense<0.000000e+00> : vector<64x128xf32>
    %11 = tpu.matmul %8, %10, %cst_9 {dimension_numbers = #tpu.dot_dimension_numbers<[1], [0], [0], [1], [0, 0, 1, 1], [], []>} : vector<64x384xbf16>, vector<384x128xbf16>, vector<64x128xf32> -> vector<64x128xf32>
    %c0_10 = arith.constant 0 : index
    %c0_11 = arith.constant 0 : index
    %c0_12 = arith.constant 0 : index
    %12 = vector.load %arg6[%c0_10, %c0_11, %c0_12] : memref<15x1x128xf32, #tpu.memory_space<vmem>>, vector<1x1x128xf32>
    %13 = vector.shape_cast %12 : vector<1x1x128xf32> to vector<1x128xf32>
    %14 = vector.broadcast %13 : vector<1x128xf32> to vector<64x128xf32>
    %15 = arith.addf %11, %14 : vector<64x128xf32>
    %cst_13 = arith.constant 0.000000e+00 : f32
    %16 = vector.broadcast %cst_13 : f32 to vector<64x128xf32>
    %17 = arith.maximumf %15, %16 : vector<64x128xf32>
    %18 = arith.truncf %17 : vector<64x128xf32> to vector<64x128xbf16>
    %cst_14 = arith.constant dense<0.000000e+00> : vector<64x128xf32>
    %19 = tpu.matmul %0, %18, %cst_14 {dimension_numbers = #tpu.dot_dimension_numbers<[1], [0], [0], [1], [0, 0, 1, 1], [], []>} : vector<64x64xbf16>, vector<64x128xbf16>, vector<64x128xf32> -> vector<64x128xf32>
    %cst_15 = arith.constant dense<0.000000e+00> : vector<64x128xf32>
    %20 = tpu.matmul %1, %18, %cst_15 {dimension_numbers = #tpu.dot_dimension_numbers<[1], [0], [0], [1], [0, 0, 1, 1], [], []>} : vector<64x64xbf16>, vector<64x128xbf16>, vector<64x128xf32> -> vector<64x128xf32>
    %21 = arith.truncf %19 : vector<64x128xf32> to vector<64x128xbf16>
    %22 = arith.truncf %20 : vector<64x128xf32> to vector<64x128xbf16>
    %23 = tpu.concatenate %21, %22, %18 in 1 : vector<64x128xbf16>, vector<64x128xbf16>, vector<64x128xbf16> -> vector<64x384xbf16>
    %c1 = arith.constant 1 : index
    %c0_16 = arith.constant 0 : index
    %c0_17 = arith.constant 0 : index
    %24 = vector.load %arg3[%c1, %c0_16, %c0_17] : memref<2x384x128xbf16, #tpu.memory_space<vmem>>, vector<1x384x128xbf16>
    %25 = vector.shape_cast %24 : vector<1x384x128xbf16> to vector<384x128xbf16>
    %cst_18 = arith.constant dense<0.000000e+00> : vector<64x128xf32>
    %26 = tpu.matmul %23, %25, %cst_18 {dimension_numbers = #tpu.dot_dimension_numbers<[1], [0], [0], [1], [0, 0, 1, 1], [], []>} : vector<64x384xbf16>, vector<384x128xbf16>, vector<64x128xf32> -> vector<64x128xf32>
    %c1_19 = arith.constant 1 : index
    %c0_20 = arith.constant 0 : index
    %c0_21 = arith.constant 0 : index
    %27 = vector.load %arg6[%c1_19, %c0_20, %c0_21] : memref<15x1x128xf32, #tpu.memory_space<vmem>>, vector<1x1x128xf32>
    %28 = vector.shape_cast %27 : vector<1x1x128xf32> to vector<1x128xf32>
    %29 = vector.broadcast %28 : vector<1x128xf32> to vector<64x128xf32>
    %30 = arith.addf %26, %29 : vector<64x128xf32>
    %cst_22 = arith.constant 0.000000e+00 : f32
    %31 = vector.broadcast %cst_22 : f32 to vector<64x128xf32>
    %32 = arith.maximumf %30, %31 : vector<64x128xf32>
    %33 = arith.truncf %32 : vector<64x128xf32> to vector<64x128xbf16>
    %c0_23 = arith.constant 0 : index
    %c0_24 = arith.constant 0 : index
    %c0_25 = arith.constant 0 : index
    %34 = vector.load %arg4[%c0_23, %c0_24, %c0_25] : memref<5x128x128xbf16, #tpu.memory_space<vmem>>, vector<1x128x128xbf16>
    %35 = vector.shape_cast %34 : vector<1x128x128xbf16> to vector<128x128xbf16>
    %cst_26 = arith.constant dense<0.000000e+00> : vector<64x128xf32>
    %36 = tpu.matmul %33, %35, %cst_26 {dimension_numbers = #tpu.dot_dimension_numbers<[1], [0], [0], [1], [0, 0, 1, 1], [], []>} : vector<64x128xbf16>, vector<128x128xbf16>, vector<64x128xf32> -> vector<64x128xf32>
    %c2 = arith.constant 2 : index
    %c0_27 = arith.constant 0 : index
    %c0_28 = arith.constant 0 : index
    %37 = vector.load %arg6[%c2, %c0_27, %c0_28] : memref<15x1x128xf32, #tpu.memory_space<vmem>>, vector<1x1x128xf32>
    %38 = vector.shape_cast %37 : vector<1x1x128xf32> to vector<1x128xf32>
    %39 = vector.broadcast %38 : vector<1x128xf32> to vector<64x128xf32>
    %40 = arith.addf %36, %39 : vector<64x128xf32>
    %cst_29 = arith.constant 0.000000e+00 : f32
    %41 = vector.broadcast %cst_29 : f32 to vector<64x128xf32>
    %42 = arith.maximumf %40, %41 : vector<64x128xf32>
    %43 = arith.truncf %42 : vector<64x128xf32> to vector<64x128xbf16>
    %c1_30 = arith.constant 1 : index
    %c0_31 = arith.constant 0 : index
    %c0_32 = arith.constant 0 : index
    %44 = vector.load %arg4[%c1_30, %c0_31, %c0_32] : memref<5x128x128xbf16, #tpu.memory_space<vmem>>, vector<1x128x128xbf16>
    %45 = vector.shape_cast %44 : vector<1x128x128xbf16> to vector<128x128xbf16>
    %cst_33 = arith.constant dense<0.000000e+00> : vector<64x128xf32>
    %46 = tpu.matmul %43, %45, %cst_33 {dimension_numbers = #tpu.dot_dimension_numbers<[1], [0], [0], [1], [0, 0, 1, 1], [], []>} : vector<64x128xbf16>, vector<128x128xbf16>, vector<64x128xf32> -> vector<64x128xf32>
    %c3 = arith.constant 3 : index
    %c0_34 = arith.constant 0 : index
    %c0_35 = arith.constant 0 : index
    %47 = vector.load %arg6[%c3, %c0_34, %c0_35] : memref<15x1x128xf32, #tpu.memory_space<vmem>>, vector<1x1x128xf32>
    %48 = vector.shape_cast %47 : vector<1x1x128xf32> to vector<1x128xf32>
    %49 = vector.broadcast %48 : vector<1x128xf32> to vector<64x128xf32>
    %50 = arith.addf %46, %49 : vector<64x128xf32>
    %cst_36 = arith.constant dense<0.000000e+00> : vector<128xf32>
    %51 = vector.multi_reduction <add>, %50, %cst_36 [0] : vector<64x128xf32> to vector<128xf32>
    %52 = vector.shape_cast %51 : vector<128xf32> to vector<1x128xf32>
    %cst_37 = arith.constant 6.400000e+01 : f32
    %53 = vector.broadcast %cst_37 : f32 to vector<1x128xf32>
    %54 = arith.divf %52, %53 : vector<1x128xf32>
    %c6 = arith.constant 6 : index
    %c0_38 = arith.constant 0 : index
    %c0_39 = arith.constant 0 : index
    %55 = vector.load %arg6[%c6, %c0_38, %c0_39] : memref<15x1x128xf32, #tpu.memory_space<vmem>>, vector<1x1x128xf32>
    %56 = vector.shape_cast %55 : vector<1x1x128xf32> to vector<1x128xf32>
    %57 = arith.mulf %56, %54 : vector<1x128xf32>
    %58 = vector.broadcast %57 : vector<1x128xf32> to vector<64x128xf32>
    %59 = arith.subf %50, %58 : vector<64x128xf32>
    %60 = arith.mulf %59, %59 : vector<64x128xf32>
    %cst_40 = arith.constant dense<0.000000e+00> : vector<128xf32>
    %61 = vector.multi_reduction <add>, %60, %cst_40 [0] : vector<64x128xf32> to vector<128xf32>
    %62 = vector.shape_cast %61 : vector<128xf32> to vector<1x128xf32>
    %cst_41 = arith.constant 6.400000e+01 : f32
    %63 = vector.broadcast %cst_41 : f32 to vector<1x128xf32>
    %64 = arith.divf %62, %63 : vector<1x128xf32>
    %c4 = arith.constant 4 : index
    %c0_42 = arith.constant 0 : index
    %c0_43 = arith.constant 0 : index
    %65 = vector.load %arg6[%c4, %c0_42, %c0_43] : memref<15x1x128xf32, #tpu.memory_space<vmem>>, vector<1x1x128xf32>
    %66 = vector.shape_cast %65 : vector<1x1x128xf32> to vector<1x128xf32>
    %67 = vector.broadcast %66 : vector<1x128xf32> to vector<64x128xf32>
    %68 = arith.mulf %67, %59 : vector<64x128xf32>
    %cst_44 = arith.constant 9.99999974E-6 : f32
    %69 = vector.broadcast %cst_44 : f32 to vector<1x128xf32>
    %70 = arith.addf %64, %69 : vector<1x128xf32>
    %71 = math.rsqrt %70 : vector<1x128xf32>
    %72 = vector.broadcast %71 : vector<1x128xf32> to vector<64x128xf32>
    %73 = arith.mulf %68, %72 : vector<64x128xf32>
    %c5 = arith.constant 5 : index
    %c0_45 = arith.constant 0 : index
    %c0_46 = arith.constant 0 : index
    %74 = vector.load %arg6[%c5, %c0_45, %c0_46] : memref<15x1x128xf32, #tpu.memory_space<vmem>>, vector<1x1x128xf32>
    %75 = vector.shape_cast %74 : vector<1x1x128xf32> to vector<1x128xf32>
    %76 = vector.broadcast %75 : vector<1x128xf32> to vector<64x128xf32>
    %77 = arith.addf %73, %76 : vector<64x128xf32>
    %78 = arith.truncf %77 : vector<64x128xf32> to vector<64x128xbf16>
    %79 = tpu.iota {dimensions = array<i32: 1>} : vector<1x128xi32>
    %c16_i32 = arith.constant 16 : i32
    %80 = vector.broadcast %c16_i32 : i32 to vector<1x128xi32>
    %81 = arith.cmpi slt, %79, %80 : vector<1x128xi32>
    %82 = arith.extui %81 : vector<1x128xi1> to vector<1x128xi32>
    %83 = arith.sitofp %82 : vector<1x128xi32> to vector<1x128xf32>
    %c0_47 = arith.constant 0 : index
    %c0_48 = arith.constant 0 : index
    %84 = vector.load %arg5[%c0_47, %c0_48] : memref<128x256xbf16, #tpu.memory_space<vmem>>, vector<128x256xbf16>
    %cst_49 = arith.constant dense<0.000000e+00> : vector<64x256xf32>
    %85 = tpu.matmul %78, %84, %cst_49 {dimension_numbers = #tpu.dot_dimension_numbers<[1], [0], [0], [1], [0, 0, 1, 1], [], []>} : vector<64x128xbf16>, vector<128x256xbf16>, vector<64x256xf32> -> vector<64x256xf32>
    %86 = vector.extract_strided_slice %85 {offsets = [0, 0], sizes = [64, 128], strides = [1, 1]} : vector<64x256xf32> to vector<64x128xf32>
    %c7 = arith.constant 7 : index
    %c0_50 = arith.constant 0 : index
    %c0_51 = arith.constant 0 : index
    %87 = vector.load %arg6[%c7, %c0_50, %c0_51] : memref<15x1x128xf32, #tpu.memory_space<vmem>>, vector<1x1x128xf32>
    %88 = vector.shape_cast %87 : vector<1x1x128xf32> to vector<1x128xf32>
    %89 = vector.broadcast %88 : vector<1x128xf32> to vector<64x128xf32>
    %90 = arith.addf %86, %89 : vector<64x128xf32>
    %c9 = arith.constant 9 : index
    %c0_52 = arith.constant 0 : index
    %c0_53 = arith.constant 0 : index
    %91 = vector.load %arg6[%c9, %c0_52, %c0_53] : memref<15x1x128xf32, #tpu.memory_space<vmem>>, vector<1x1x128xf32>
    %92 = vector.shape_cast %91 : vector<1x1x128xf32> to vector<1x128xf32>
    %c10 = arith.constant 10 : index
    %c0_54 = arith.constant 0 : index
    %c0_55 = arith.constant 0 : index
    %93 = vector.load %arg6[%c10, %c0_54, %c0_55] : memref<15x1x128xf32, #tpu.memory_space<vmem>>, vector<1x1x128xf32>
    %94 = vector.shape_cast %93 : vector<1x1x128xf32> to vector<1x128xf32>
    %c3_56 = arith.constant 3 : index
    %c0_57 = arith.constant 0 : index
    %c0_58 = arith.constant 0 : index
    %95 = vector.load %arg4[%c3_56, %c0_57, %c0_58] : memref<5x128x128xbf16, #tpu.memory_space<vmem>>, vector<1x128x128xbf16>
    %96 = vector.shape_cast %95 : vector<1x128x128xbf16> to vector<128x128xbf16>
    %c11 = arith.constant 11 : index
    %c0_59 = arith.constant 0 : index
    %c0_60 = arith.constant 0 : index
    %97 = vector.load %arg6[%c11, %c0_59, %c0_60] : memref<15x1x128xf32, #tpu.memory_space<vmem>>, vector<1x1x128xf32>
    %98 = vector.shape_cast %97 : vector<1x1x128xf32> to vector<1x128xf32>
    %cst_61 = arith.constant 0.000000e+00 : f32
    %99 = vector.broadcast %cst_61 : f32 to vector<64x128xf32>
    %100 = arith.maximumf %90, %99 : vector<64x128xf32>
    %cst_62 = arith.constant dense<0.000000e+00> : vector<64xf32>
    %101 = vector.multi_reduction <add>, %100, %cst_62 [1] : vector<64x128xf32> to vector<64xf32>
    %102 = vector.shape_cast %101 : vector<64xf32> to vector<64x1xf32>
    %cst_63 = arith.constant 6.250000e-02 : f32
    %103 = vector.broadcast %cst_63 : f32 to vector<64x1xf32>
    %104 = arith.mulf %102, %103 : vector<64x1xf32>
    %105 = vector.broadcast %104 : vector<64x1xf32> to vector<64x128xf32>
    %106 = arith.subf %100, %105 : vector<64x128xf32>
    %107 = vector.broadcast %83 : vector<1x128xf32> to vector<64x128xf32>
    %108 = arith.mulf %106, %107 : vector<64x128xf32>
    %109 = arith.mulf %108, %108 : vector<64x128xf32>
    %cst_64 = arith.constant dense<0.000000e+00> : vector<64xf32>
    %110 = vector.multi_reduction <add>, %109, %cst_64 [1] : vector<64x128xf32> to vector<64xf32>
    %111 = vector.shape_cast %110 : vector<64xf32> to vector<64x1xf32>
    %cst_65 = arith.constant 6.250000e-02 : f32
    %112 = vector.broadcast %cst_65 : f32 to vector<64x1xf32>
    %113 = arith.mulf %111, %112 : vector<64x1xf32>
    %cst_66 = arith.constant 9.99999974E-6 : f32
    %114 = vector.broadcast %cst_66 : f32 to vector<64x1xf32>
    %115 = arith.addf %113, %114 : vector<64x1xf32>
    %116 = math.rsqrt %115 : vector<64x1xf32>
    %117 = vector.broadcast %116 : vector<64x1xf32> to vector<64x128xf32>
    %118 = arith.mulf %108, %117 : vector<64x128xf32>
    %119 = vector.broadcast %92 : vector<1x128xf32> to vector<64x128xf32>
    %120 = arith.mulf %118, %119 : vector<64x128xf32>
    %121 = vector.broadcast %94 : vector<1x128xf32> to vector<64x128xf32>
    %122 = arith.addf %120, %121 : vector<64x128xf32>
    %123 = arith.truncf %122 : vector<64x128xf32> to vector<64x128xbf16>
    %cst_67 = arith.constant dense<0.000000e+00> : vector<64x128xf32>
    %124 = tpu.matmul %123, %96, %cst_67 {dimension_numbers = #tpu.dot_dimension_numbers<[1], [0], [0], [1], [0, 0, 1, 1], [], []>} : vector<64x128xbf16>, vector<128x128xbf16>, vector<64x128xf32> -> vector<64x128xf32>
    %125 = vector.broadcast %98 : vector<1x128xf32> to vector<64x128xf32>
    %126 = arith.addf %124, %125 : vector<64x128xf32>
    %c0_68 = arith.constant 0 : index
    %c0_69 = arith.constant 0 : index
    %127 = vector.load %arg7[%c0_68, %c0_69] : memref<64x128xf32, #tpu.memory_space<vmem>>, vector<64x128xf32>
    tpu.vector_store %arg7[%c0_68, %c0_69], %126 {strides = array<i32>} : memref<64x128xf32, #tpu.memory_space<vmem>>, vector<64x128xf32>,
    %128 = vector.extract_strided_slice %85 {offsets = [0, 128], sizes = [64, 128], strides = [1, 1]} : vector<64x256xf32> to vector<64x128xf32>
    %129 = arith.truncf %126 : vector<64x128xf32> to vector<64x128xbf16>
    %c2_70 = arith.constant 2 : index
    %c0_71 = arith.constant 0 : index
    %c0_72 = arith.constant 0 : index
    %130 = vector.load %arg4[%c2_70, %c0_71, %c0_72] : memref<5x128x128xbf16, #tpu.memory_space<vmem>>, vector<1x128x128xbf16>
    %131 = vector.shape_cast %130 : vector<1x128x128xbf16> to vector<128x128xbf16>
    %cst_73 = arith.constant dense<0.000000e+00> : vector<64x128xf32>
    %132 = tpu.matmul %129, %131, %cst_73 {dimension_numbers = #tpu.dot_dimension_numbers<[1], [0], [0], [1], [0, 0, 1, 1], [], []>} : vector<64x128xbf16>, vector<128x128xbf16>, vector<64x128xf32> -> vector<64x128xf32>
    %133 = arith.addf %128, %132 : vector<64x128xf32>
    %c8 = arith.constant 8 : index
    %c0_74 = arith.constant 0 : index
    %c0_75 = arith.constant 0 : index
    %134 = vector.load %arg6[%c8, %c0_74, %c0_75] : memref<15x1x128xf32, #tpu.memory_space<vmem>>, vector<1x1x128xf32>
    %135 = vector.shape_cast %134 : vector<1x1x128xf32> to vector<1x128xf32>
    %136 = vector.broadcast %135 : vector<1x128xf32> to vector<64x128xf32>
    %137 = arith.addf %133, %136 : vector<64x128xf32>
    %c12 = arith.constant 12 : index
    %c0_76 = arith.constant 0 : index
    %c0_77 = arith.constant 0 : index
    %138 = vector.load %arg6[%c12, %c0_76, %c0_77] : memref<15x1x128xf32, #tpu.memory_space<vmem>>, vector<1x1x128xf32>
    %139 = vector.shape_cast %138 : vector<1x1x128xf32> to vector<1x128xf32>
    %c13 = arith.constant 13 : index
    %c0_78 = arith.constant 0 : index
    %c0_79 = arith.constant 0 : index
    %140 = vector.load %arg6[%c13, %c0_78, %c0_79] : memref<15x1x128xf32, #tpu.memory_space<vmem>>, vector<1x1x128xf32>
    %141 = vector.shape_cast %140 : vector<1x1x128xf32> to vector<1x128xf32>
    %c4_80 = arith.constant 4 : index
    %c0_81 = arith.constant 0 : index
    %c0_82 = arith.constant 0 : index
    %142 = vector.load %arg4[%c4_80, %c0_81, %c0_82] : memref<5x128x128xbf16, #tpu.memory_space<vmem>>, vector<1x128x128xbf16>
    %143 = vector.shape_cast %142 : vector<1x128x128xbf16> to vector<128x128xbf16>
    %c14 = arith.constant 14 : index
    %c0_83 = arith.constant 0 : index
    %c0_84 = arith.constant 0 : index
    %144 = vector.load %arg6[%c14, %c0_83, %c0_84] : memref<15x1x128xf32, #tpu.memory_space<vmem>>, vector<1x1x128xf32>
    %145 = vector.shape_cast %144 : vector<1x1x128xf32> to vector<1x128xf32>
    %cst_85 = arith.constant 0.000000e+00 : f32
    %146 = vector.broadcast %cst_85 : f32 to vector<64x128xf32>
    %147 = arith.maximumf %137, %146 : vector<64x128xf32>
    %cst_86 = arith.constant dense<0.000000e+00> : vector<64xf32>
    %148 = vector.multi_reduction <add>, %147, %cst_86 [1] : vector<64x128xf32> to vector<64xf32>
    %149 = vector.shape_cast %148 : vector<64xf32> to vector<64x1xf32>
    %cst_87 = arith.constant 6.250000e-02 : f32
    %150 = vector.broadcast %cst_87 : f32 to vector<64x1xf32>
    %151 = arith.mulf %149, %150 : vector<64x1xf32>
    %152 = vector.broadcast %151 : vector<64x1xf32> to vector<64x128xf32>
    %153 = arith.subf %147, %152 : vector<64x128xf32>
    %154 = vector.broadcast %83 : vector<1x128xf32> to vector<64x128xf32>
    %155 = arith.mulf %153, %154 : vector<64x128xf32>
    %156 = arith.mulf %155, %155 : vector<64x128xf32>
    %cst_88 = arith.constant dense<0.000000e+00> : vector<64xf32>
    %157 = vector.multi_reduction <add>, %156, %cst_88 [1] : vector<64x128xf32> to vector<64xf32>
    %158 = vector.shape_cast %157 : vector<64xf32> to vector<64x1xf32>
    %cst_89 = arith.constant 6.250000e-02 : f32
    %159 = vector.broadcast %cst_89 : f32 to vector<64x1xf32>
    %160 = arith.mulf %158, %159 : vector<64x1xf32>
    %cst_90 = arith.constant 9.99999974E-6 : f32
    %161 = vector.broadcast %cst_90 : f32 to vector<64x1xf32>
    %162 = arith.addf %160, %161 : vector<64x1xf32>
    %163 = math.rsqrt %162 : vector<64x1xf32>
    %164 = vector.broadcast %163 : vector<64x1xf32> to vector<64x128xf32>
    %165 = arith.mulf %155, %164 : vector<64x128xf32>
    %166 = vector.broadcast %139 : vector<1x128xf32> to vector<64x128xf32>
    %167 = arith.mulf %165, %166 : vector<64x128xf32>
    %168 = vector.broadcast %141 : vector<1x128xf32> to vector<64x128xf32>
    %169 = arith.addf %167, %168 : vector<64x128xf32>
    %170 = arith.truncf %169 : vector<64x128xf32> to vector<64x128xbf16>
    %cst_91 = arith.constant dense<0.000000e+00> : vector<64x128xf32>
    %171 = tpu.matmul %170, %143, %cst_91 {dimension_numbers = #tpu.dot_dimension_numbers<[1], [0], [0], [1], [0, 0, 1, 1], [], []>} : vector<64x128xbf16>, vector<128x128xbf16>, vector<64x128xf32> -> vector<64x128xf32>
    %172 = vector.broadcast %145 : vector<1x128xf32> to vector<64x128xf32>
    %173 = arith.addf %171, %172 : vector<64x128xf32>
    %c0_92 = arith.constant 0 : index
    %c0_93 = arith.constant 0 : index
    %174 = vector.load %arg8[%c0_92, %c0_93] : memref<64x128xf32, #tpu.memory_space<vmem>>, vector<64x128xf32>
    tpu.vector_store %arg8[%c0_92, %c0_93], %173 {strides = array<i32>} : memref<64x128xf32, #tpu.memory_space<vmem>>, vector<64x128xf32>,
    return
  }
}

</mosaic_0001>

<llo_original>
// kernel: tpu_custom_call.1
$region0: #{tpu_custom_call.1}
  #allocation0 [shape = 'u32[]', space=smem, size = 0x4, offset = 0x4, fixed_abs, tag = 'smem constant byte address 0x4 - core index']
  #allocation1 [shape = 'u32[144,128]{1,0:T(1,128)}', space=vmem, size = 0x12000, scoped, tag = 'internal scratch']
  %s0 = inlined_call_operand.hbm [shape: f32[64,128], index: 0, kind: input, shape index: {}]
  %s1 = inlined_call_operand.hbm [shape: bf16[64,64], index: 1, kind: input, shape index: {}]
  %s2 = inlined_call_operand.hbm [shape: bf16[64,64], index: 2, kind: input, shape index: {}]
  %s3 = inlined_call_operand.hbm [shape: bf16[2,384,128], index: 3, kind: input, shape index: {}]
  %s4 = inlined_call_operand.hbm [shape: bf16[5,128,128], index: 4, kind: input, shape index: {}]
  %s5 = inlined_call_operand.hbm [shape: bf16[128,256], index: 5, kind: input, shape index: {}]
  %s6 = inlined_call_operand.vmem [shape: f32[15,1,128], index: 6, kind: input, shape index: {}]
  %s7 = inlined_call_operand.hbm [shape: f32[64,128], index: 7, kind: output, shape index: {0}]
  %s8 = inlined_call_operand.hbm [shape: f32[64,128], index: 8, kind: output, shape index: {1}]
  %9 = xla_tuple %s7, %s8
  %s10 = sld [smem:[#allocation0]]
  $region70: #{tpu_custom_call.1} parent=0
    _
  %s12 = ssub.s32 1, %s10
  %s13 = scalar_select 0, %s12, %s10
  $region1: #{tpu_custom_call.1} parent=0
    #allocation2 [shape = 'u8[32768]{0}', space=vmem, size = 0x8000, scoped, tag = 'input window, operand 0, single buffered']
    #allocation3 [shape = 's32[1]{0}', space=sflag, size = 0x4, scoped, tag = 'scoped memory for tpu_custom_call.1']
    #allocation4 [shape = 's32[1]{0}', space=sflag, size = 0x4, scoped, tag = 'scoped memory for tpu_custom_call.1']
    #allocation5 [shape = 'u8[16384]{0}', space=vmem, size = 0x4000, scoped, tag = 'input window, operand 1, single buffered']
    #allocation6 [shape = 's32[1]{0}', space=sflag, size = 0x4, scoped, tag = 'scoped memory for tpu_custom_call.1']
    #allocation7 [shape = 'u8[16384]{0}', space=vmem, size = 0x4000, scoped, tag = 'input window, operand 2, single buffered']
    #allocation8 [shape = 'u8[196608]{0}', space=vmem, size = 0x30000, scoped, tag = 'input window, operand 3, single buffered']
    #allocation9 [shape = 's32[1]{0}', space=sflag, size = 0x4, scoped, tag = 'scoped memory for tpu_custom_call.1']
    #allocation10 [shape = 'u8[163840]{0}', space=vmem, size = 0x28000, scoped, tag = 'input window, operand 4, single buffered']
    #allocation11 [shape = 'u8[65536]{0}', space=vmem, size = 0x10000, scoped, tag = 'input window, operand 5, single buffered']
    #allocation12 [shape = 's32[1]{0}', space=sflag, size = 0x4, scoped, tag = 'scoped memory for tpu_custom_call.1']
    #allocation13 [shape = 'u8[32768]{0}', space=vmem, size = 0x8000, scoped, tag = 'output window, operand 0, single buffered']
    #allocation14 [shape = 'u8[32768]{0}', space=vmem, size = 0x8000, scoped, tag = 'output window, operand 1, single buffered']
    #allocation15 [shape = 's32[1]{0}', space=sflag, size = 0x4, scoped, tag = 'scoped memory for tpu_custom_call.1']
    %14 = vsyncpa [#allocation3], 0
    %15 = vsyncpa [#allocation6], 0
    %16 = vsyncpa [#allocation9], 0
    %17 = vsyncpa [#allocation12], 0
    %18 = vsyncpa [#allocation4], 0
    %19 = vsyncpa [#allocation15], 0
    // Predicated region
    $region2: #{tpu_custom_call.1} parent=1 // pred_check
      _
    $region3: #{tpu_custom_call.1} parent=1 // pred_check_branch
      %21 = sbr.rel (0) target = $region5
    $region4: #{tpu_custom_call.1} parent=1 // pred_region
      %s23 = ssub.s32 1024, 1024
      %24 = vsyncadd [#allocation3], %s23
      %s25 = sshll.u32 [#allocation2], 4
      %s26 = int_to_ptr.vmem [resolvable:$true] %s25
      %31 = dma.hbm_to_vmem [thread:$0]  %s0, 1024, %s26, [#allocation3], 128, 128, 8
    $region5: #{tpu_custom_call.1} parent=1 // pred_fallthru
      _
    // Predicated region
    $region6: #{tpu_custom_call.1} parent=1 // pred_check
      _
    $region7: #{tpu_custom_call.1} parent=1 // pred_check_branch
      %33 = sbr.rel (0) target = $region9
    $region8: #{tpu_custom_call.1} parent=1 // pred_region
      %s35 = ssub.s32 512, 512
      %36 = vsyncadd [#allocation6], %s35
      %s37 = sshll.u32 [#allocation5], 4
      %s38 = int_to_ptr.vmem [resolvable:$true] %s37
      %43 = dma.hbm_to_vmem [thread:$0]  %s1, 512, %s38, [#allocation6], 64, 64, 4
    $region9: #{tpu_custom_call.1} parent=1 // pred_fallthru
      _
    // Predicated region
    $region10: #{tpu_custom_call.1} parent=1 // pred_check
      _
    $region11: #{tpu_custom_call.1} parent=1 // pred_check_branch
      %45 = sbr.rel (0) target = $region13
    $region12: #{tpu_custom_call.1} parent=1 // pred_region
      %s47 = ssub.s32 512, 512
      %48 = vsyncadd [#allocation6], %s47
      %s49 = sshll.u32 [#allocation7], 4
      %s50 = int_to_ptr.vmem [resolvable:$true] %s49
      %55 = dma.hbm_to_vmem [thread:$0]  %s2, 512, %s50, [#allocation6], 64, 64, 4
    $region13: #{tpu_custom_call.1} parent=1 // pred_fallthru
      _
    // Predicated region
    $region14: #{tpu_custom_call.1} parent=1 // pred_check
      _
    $region15: #{tpu_custom_call.1} parent=1 // pred_check_branch
      %57 = sbr.rel (0) target = $region17
    $region16: #{tpu_custom_call.1} parent=1 // pred_region
      %s59 = ssub.s32 6144, 6144
      %60 = vsyncadd [#allocation9], %s59
      %s61 = sshll.u32 [#allocation8], 4
      %s62 = int_to_ptr.vmem [resolvable:$true] %s61
      %67 = dma.hbm_to_vmem [thread:$0]  %s3, 6144, %s62, [#allocation9], 64, 64, 4
    $region17: #{tpu_custom_call.1} parent=1 // pred_fallthru
      _
    // Predicated region
    $region18: #{tpu_custom_call.1} parent=1 // pred_check
      _
    $region19: #{tpu_custom_call.1} parent=1 // pred_check_branch
      %69 = sbr.rel (0) target = $region21
    $region20: #{tpu_custom_call.1} parent=1 // pred_region
      %s71 = ssub.s32 5120, 5120
      %72 = vsyncadd [#allocation9], %s71
      %s73 = sshll.u32 [#allocation10], 4
      %s74 = int_to_ptr.vmem [resolvable:$true] %s73
      %79 = dma.hbm_to_vmem [thread:$0]  %s4, 5120, %s74, [#allocation9], 64, 64, 4
    $region21: #{tpu_custom_call.1} parent=1 // pred_fallthru
      _
    // Predicated region
    $region22: #{tpu_custom_call.1} parent=1 // pred_check
      _
    $region23: #{tpu_custom_call.1} parent=1 // pred_check_branch
      %81 = sbr.rel (0) target = $region25
    $region24: #{tpu_custom_call.1} parent=1 // pred_region
      %s83 = ssub.s32 2048, 2048
      %84 = vsyncadd [#allocation12], %s83
      %s85 = sshll.u32 [#allocation11], 4
      %s86 = int_to_ptr.vmem [resolvable:$true] %s85
      %91 = dma.hbm_to_vmem [thread:$0]  %s5, 2048, %s86, [#allocation12], 128, 128, 8
    $region25: #{tpu_custom_call.1} parent=1 // pred_fallthru
      _
    // Predicated region
    $region26: #{tpu_custom_call.1} parent=1 // pred_check
      _
    $region27: #{tpu_custom_call.1} parent=1 // pred_check_branch
      %93 = sbr.rel (0) target = $region29
    $region28: #{tpu_custom_call.1} parent=1 // pred_region
      _
    $region29: #{tpu_custom_call.1} parent=1 // pred_fallthru
      _
    // Predicated region
    $region30: #{tpu_custom_call.1} parent=1 // pred_check
      _
    $region31: #{tpu_custom_call.1} parent=1 // pred_check_branch
      %95 = sbr.rel (0) target = $region33
    $region32: #{tpu_custom_call.1} parent=1 // pred_region
      %96 = dma.done [#allocation3], 1024
    $region33: #{tpu_custom_call.1} parent=1 // pred_fallthru
      _
    // Predicated region
    $region34: #{tpu_custom_call.1} parent=1 // pred_check
      _
    $region35: #{tpu_custom_call.1} parent=1 // pred_check_branch
      %98 = sbr.rel (0) target = $region37
    $region36: #{tpu_custom_call.1} parent=1 // pred_region
      %99 = dma.done [#allocation6], 512
    $region37: #{tpu_custom_call.1} parent=1 // pred_fallthru
      _
    // Predicated region
    $region38: #{tpu_custom_call.1} parent=1 // pred_check
      _
    $region39: #{tpu_custom_call.1} parent=1 // pred_check_branch
      %101 = sbr.rel (0) target = $region41
    $region40: #{tpu_custom_call.1} parent=1 // pred_region
      %102 = dma.done [#allocation6], 512
    $region41: #{tpu_custom_call.1} parent=1 // pred_fallthru
      _
    // Predicated region
    $region42: #{tpu_custom_call.1} parent=1 // pred_check
      _
    $region43: #{tpu_custom_call.1} parent=1 // pred_check_branch
      %104 = sbr.rel (0) target = $region45
    $region44: #{tpu_custom_call.1} parent=1 // pred_region
      %105 = dma.done [#allocation9], 6144
    $region45: #{tpu_custom_call.1} parent=1 // pred_fallthru
      _
    // Predicated region
    $region46: #{tpu_custom_call.1} parent=1 // pred_check
      _
    $region47: #{tpu_custom_call.1} parent=1 // pred_check_branch
      %107 = sbr.rel (0) target = $region49
    $region48: #{tpu_custom_call.1} parent=1 // pred_region
      %108 = dma.done [#allocation9], 5120
    $region49: #{tpu_custom_call.1} parent=1 // pred_fallthru
      _
    // Predicated region
    $region50: #{tpu_custom_call.1} parent=1 // pred_check
      _
    $region51: #{tpu_custom_call.1} parent=1 // pred_check_branch
      %110 = sbr.rel (0) target = $region53
    $region52: #{tpu_custom_call.1} parent=1 // pred_region
      %111 = dma.done [#allocation12], 2048
    $region53: #{tpu_custom_call.1} parent=1 // pred_fallthru
      _
    %v113 = vld [vmem:[#allocation5] sm:$0xf]
    %v114 = vld [vmem:[#allocation5 + $0x4] sm:$0xf]
    %v115 = vld [vmem:[#allocation5 + $0x8] sm:$0xf]
    %v116 = vld [vmem:[#allocation5 + $0xc] sm:$0xf]
    %v117 = vld [vmem:[#allocation5 + $0x10] sm:$0xf]
    %v118 = vld [vmem:[#allocation5 + $0x14] sm:$0xf]
    %v119 = vld [vmem:[#allocation5 + $0x18] sm:$0xf]
    %v120 = vld [vmem:[#allocation5 + $0x1c] sm:$0xf]
    %v121 = vld [vmem:[#allocation7] sm:$0xf]
    %v122 = vld [vmem:[#allocation7 + $0x4] sm:$0xf]
    %v123 = vld [vmem:[#allocation7 + $0x8] sm:$0xf]
    %v124 = vld [vmem:[#allocation7 + $0xc] sm:$0xf]
    %v125 = vld [vmem:[#allocation7 + $0x10] sm:$0xf]
    %v126 = vld [vmem:[#allocation7 + $0x14] sm:$0xf]
    %v127 = vld [vmem:[#allocation7 + $0x18] sm:$0xf]
    %v128 = vld [vmem:[#allocation7 + $0x1c] sm:$0xf]
    %v129 = vld [vmem:[#allocation2] sm:$0xff]
    %v130 = vld [vmem:[#allocation2 + $0x8] sm:$0xff]
    %v131 = vld [vmem:[#allocation2 + $0x10] sm:$0xff]
    %v132 = vld [vmem:[#allocation2 + $0x18] sm:$0xff]
    %v133 = vld [vmem:[#allocation2 + $0x20] sm:$0xff]
    %v134 = vld [vmem:[#allocation2 + $0x28] sm:$0xff]
    %v135 = vld [vmem:[#allocation2 + $0x30] sm:$0xff]
    %v136 = vld [vmem:[#allocation2 + $0x38] sm:$0xff]
    %v137 = vpack.c.bf16 %v130, %v129
    %v138 = vpack.c.bf16 %v132, %v131
    %v139 = vpack.c.bf16 %v134, %v133
    %v140 = vpack.c.bf16 %v136, %v135
    %v149 = vunpack.c.l.b16 %v113
    %v150 = vunpack.c.l.b16 %v114
    %v151 = vunpack.c.l.b16 %v115
    %v152 = vunpack.c.l.b16 %v116
    %v153 = vunpack.c.l.b16 %v117
    %v154 = vunpack.c.l.b16 %v118
    %v155 = vunpack.c.l.b16 %v119
    %v156 = vunpack.c.l.b16 %v120
    %v157 = vpack.c.b16 %v150, %v149
    %v158 = vpack.c.b16 %v152, %v151
    %v159 = vpack.c.b16 %v154, %v153
    %v160 = vpack.c.b16 %v156, %v155
    %vm161 = vcmask 523264
    %v163 = vsel %vm161, %v157, 0
    %v166 = vsel %vm161, %v158, 0
    %v169 = vsel %vm161, %v159, 0
    %v172 = vsel %vm161, %v160, 0
    %174 = vmatprep.subr.bf16.mxu0 0
    %175 = vmatpush1.bf16.msra.mxu0 %v137
    %176 = vmatprep.subr.bf16.mxu0 0
    %177 = vmatpush1.bf16.msra.mxu0 %v138
    %178 = vmatprep.subr.bf16.mxu0 0
    %179 = vmatpush1.bf16.msra.mxu0 %v139
    %180 = vmatprep.subr.bf16.mxu0 0
    %181 = vmatpush1.bf16.msra.mxu0 %v140
    %182 = vmatprep.subr.bf16.mxu0 0
    %183 = vmatpush1.bf16.msra.mxu0 0
    %184 = vmatprep.subr.bf16.mxu0 0
    %185 = vmatpush1.bf16.msra.mxu0 0
    %186 = vmatprep.subr.bf16.mxu0 0
    %187 = vmatpush1.bf16.msra.mxu0 0
    %188 = vmatprep.subr.bf16.mxu0 0
    %189 = vmatpush1.bf16.msra.mxu0 0
    %190 = vmatprep.subr.bf16.mxu0 0
    %191 = vmatpush1.bf16.msra.mxu0 0
    %192 = vmatprep.subr.bf16.mxu0 0
    %193 = vmatpush1.bf16.msra.mxu0 0
    %194 = vmatprep.subr.bf16.mxu0 0
    %195 = vmatpush1.bf16.msra.mxu0 0
    %196 = vmatprep.subr.bf16.mxu0 0
    %197 = vmatpush1.bf16.msra.mxu0 0
    %198 = vmatprep.subr.bf16.mxu0 0
    %199 = vmatpush1.bf16.msra.mxu0 0
    %200 = vmatprep.subr.bf16.mxu0 0
    %201 = vmatpush1.bf16.msra.mxu0 0
    %202 = vmatprep.subr.bf16.mxu0 0
    %203 = vmatpush1.bf16.msra.mxu0 0
    %204 = vmatprep.subr.bf16.mxu0 0
    %205 = vmatpush1.bf16.msra.mxu0 0
    %206 = vmatprep.mubr.bf16.mxu0 0
    %207 = vmatmul.mubr.bf16.gmra.mrb[0].mxu0 %v163
    %v208 = vpop.f32.mrb[0].mxu0
    %v209 = vadd.f32 0.0, %v208
    %v210 = vpop.f32.mrb[0].mxu0
    %v211 = vpop.f32.mrb[0].mxu0
    %v212 = vadd.f32 0.0, %v211
    %v213 = vpop.f32.mrb[0].mxu0
    %214 = vmatprep.mubr.bf16.mxu0 0
    %215 = vmatmul.mubr.bf16.gmra.mrb[0].mxu0 %v166
    %v216 = vpop.f32.mrb[0].mxu0
    %v217 = vadd.f32 0.0, %v216
    %v218 = vpop.f32.mrb[0].mxu0
    %v219 = vpop.f32.mrb[0].mxu0
    %v220 = vadd.f32 0.0, %v219
    %v221 = vpop.f32.mrb[0].mxu0
    %222 = vmatprep.mubr.bf16.mxu0 0
    %223 = vmatmul.mubr.bf16.gmra.mrb[0].mxu0 %v169
    %v224 = vpop.f32.mrb[0].mxu0
    %v225 = vadd.f32 0.0, %v224
    %v226 = vpop.f32.mrb[0].mxu0
    %v227 = vpop.f32.mrb[0].mxu0
    %v228 = vadd.f32 0.0, %v227
    %v229 = vpop.f32.mrb[0].mxu0
    %230 = vmatprep.mubr.bf16.mxu0 0
    %231 = vmatmul.mubr.bf16.gmra.mrb[0].mxu0 %v172
    %v232 = vpop.f32.mrb[0].mxu0
    %v233 = vadd.f32 0.0, %v232
    %v234 = vpop.f32.mrb[0].mxu0
    %v235 = vpop.f32.mrb[0].mxu0
    %v236 = vadd.f32 0.0, %v235
    %v237 = vpop.f32.mrb[0].mxu0
    %238 = vdwg.mxu0
    %v247 = vunpack.c.l.b16 %v121
    %v248 = vunpack.c.l.b16 %v122
    %v249 = vunpack.c.l.b16 %v123
    %v250 = vunpack.c.l.b16 %v124
    %v251 = vunpack.c.l.b16 %v125
    %v252 = vunpack.c.l.b16 %v126
    %v253 = vunpack.c.l.b16 %v127
    %v254 = vunpack.c.l.b16 %v128
    %v255 = vpack.c.b16 %v248, %v247
    %v256 = vpack.c.b16 %v250, %v249
    %v257 = vpack.c.b16 %v252, %v251
    %v258 = vpack.c.b16 %v254, %v253
    %v260 = vsel %vm161, %v255, 0
    %v263 = vsel %vm161, %v256, 0
    %v266 = vsel %vm161, %v257, 0
    %v269 = vsel %vm161, %v258, 0
    %271 = vmatprep.subr.bf16.mxu0 0
    %272 = vmatpush1.bf16.msra.mxu0 %v137
    %273 = vmatprep.subr.bf16.mxu0 0
    %274 = vmatpush1.bf16.msra.mxu0 %v138
    %275 = vmatprep.subr.bf16.mxu0 0
    %276 = vmatpush1.bf16.msra.mxu0 %v139
    %277 = vmatprep.subr.bf16.mxu0 0
    %278 = vmatpush1.bf16.msra.mxu0 %v140
    %279 = vmatprep.subr.bf16.mxu0 0
    %280 = vmatpush1.bf16.msra.mxu0 0
    %281 = vmatprep.subr.bf16.mxu0 0
    %282 = vmatpush1.bf16.msra.mxu0 0
    %283 = vmatprep.subr.bf16.mxu0 0
    %284 = vmatpush1.bf16.msra.mxu0 0
    %285 = vmatprep.subr.bf16.mxu0 0
    %286 = vmatpush1.bf16.msra.mxu0 0
    %287 = vmatprep.subr.bf16.mxu0 0
    %288 = vmatpush1.bf16.msra.mxu0 0
    %289 = vmatprep.subr.bf16.mxu0 0
    %290 = vmatpush1.bf16.msra.mxu0 0
    %291 = vmatprep.subr.bf16.mxu0 0
    %292 = vmatpush1.bf16.msra.mxu0 0
    %293 = vmatprep.subr.bf16.mxu0 0
    %294 = vmatpush1.bf16.msra.mxu0 0
    %295 = vmatprep.subr.bf16.mxu0 0
    %296 = vmatpush1.bf16.msra.mxu0 0
    %297 = vmatprep.subr.bf16.mxu0 0
    %298 = vmatpush1.bf16.msra.mxu0 0
    %299 = vmatprep.subr.bf16.mxu0 0
    %300 = vmatpush1.bf16.msra.mxu0 0
    %301 = vmatprep.subr.bf16.mxu0 0
    %302 = vmatpush1.bf16.msra.mxu0 0
    %303 = vmatprep.mubr.bf16.mxu0 0
    %304 = vmatmul.mubr.bf16.gmra.mrb[0].mxu0 %v260
    %v305 = vpop.f32.mrb[0].mxu0
    %v306 = vadd.f32 0.0, %v305
    %v307 = vpop.f32.mrb[0].mxu0
    %v308 = vpop.f32.mrb[0].mxu0
    %v309 = vadd.f32 0.0, %v308
    %v310 = vpop.f32.mrb[0].mxu0
    %311 = vmatprep.mubr.bf16.mxu0 0
    %312 = vmatmul.mubr.bf16.gmra.mrb[0].mxu0 %v263
    %v313 = vpop.f32.mrb[0].mxu0
    %v314 = vadd.f32 0.0, %v313
    %v315 = vpop.f32.mrb[0].mxu0
    %v316 = vpop.f32.mrb[0].mxu0
    %v317 = vadd.f32 0.0, %v316
    %v318 = vpop.f32.mrb[0].mxu0
    %319 = vmatprep.mubr.bf16.mxu0 0
    %320 = vmatmul.mubr.bf16.gmra.mrb[0].mxu0 %v266
    %v321 = vpop.f32.mrb[0].mxu0
    %v322 = vadd.f32 0.0, %v321
    %v323 = vpop.f32.mrb[0].mxu0
    %v324 = vpop.f32.mrb[0].mxu0
    %v325 = vadd.f32 0.0, %v324
    %v326 = vpop.f32.mrb[0].mxu0
    %327 = vmatprep.mubr.bf16.mxu0 0
    %328 = vmatmul.mubr.bf16.gmra.mrb[0].mxu0 %v269
    %v329 = vpop.f32.mrb[0].mxu0
    %v330 = vadd.f32 0.0, %v329
    %v331 = vpop.f32.mrb[0].mxu0
    %v332 = vpop.f32.mrb[0].mxu0
    %v333 = vadd.f32 0.0, %v332
    %v334 = vpop.f32.mrb[0].mxu0
    %335 = vdwg.mxu0
    %v336 = vpack.c.bf16 %v212, %v209
    %v337 = vpack.c.bf16 %v220, %v217
    %v338 = vpack.c.bf16 %v228, %v225
    %v339 = vpack.c.bf16 %v236, %v233
    %v340 = vpack.c.bf16 %v309, %v306
    %v341 = vpack.c.bf16 %v317, %v314
    %v342 = vpack.c.bf16 %v325, %v322
    %v343 = vpack.c.bf16 %v333, %v330
    %v344 = vld [vmem:[#allocation8] sm:$0xf]
    %v345 = vld [vmem:[#allocation8 + $0x4] sm:$0xf]
    %v346 = vld [vmem:[#allocation8 + $0x8] sm:$0xf]
    %v347 = vld [vmem:[#allocation8 + $0xc] sm:$0xf]
    %v348 = vld [vmem:[#allocation8 + $0x10] sm:$0xf]
    %v349 = vld [vmem:[#allocation8 + $0x14] sm:$0xf]
    %v350 = vld [vmem:[#allocation8 + $0x18] sm:$0xf]
    %v351 = vld [vmem:[#allocation8 + $0x1c] sm:$0xf]
    %v352 = vld [vmem:[#allocation8 + $0x20] sm:$0xf]
    %v353 = vld [vmem:[#allocation8 + $0x24] sm:$0xf]
    %v354 = vld [vmem:[#allocation8 + $0x28] sm:$0xf]
    %v355 = vld [vmem:[#allocation8 + $0x2c] sm:$0xf]
    %v356 = vld [vmem:[#allocation8 + $0x30] sm:$0xf]
    %v357 = vld [vmem:[#allocation8 + $0x34] sm:$0xf]
    %v358 = vld [vmem:[#allocation8 + $0x38] sm:$0xf]
    %v359 = vld [vmem:[#allocation8 + $0x3c] sm:$0xf]
    %v360 = vld [vmem:[#allocation8 + $0x40] sm:$0xf]
    %v361 = vld [vmem:[#allocation8 + $0x44] sm:$0xf]
    %v362 = vld [vmem:[#allocation8 + $0x48] sm:$0xf]
    %v363 = vld [vmem:[#allocation8 + $0x4c] sm:$0xf]
    %v364 = vld [vmem:[#allocation8 + $0x50] sm:$0xf]
    %v365 = vld [vmem:[#allocation8 + $0x54] sm:$0xf]
    %v366 = vld [vmem:[#allocation8 + $0x58] sm:$0xf]
    %v367 = vld [vmem:[#allocation8 + $0x5c] sm:$0xf]
    %v368 = vld [vmem:[#allocation8 + $0x60] sm:$0xf]
    %v369 = vld [vmem:[#allocation8 + $0x64] sm:$0xf]
    %v370 = vld [vmem:[#allocation8 + $0x68] sm:$0xf]
    %v371 = vld [vmem:[#allocation8 + $0x6c] sm:$0xf]
    %v372 = vld [vmem:[#allocation8 + $0x70] sm:$0xf]
    %v373 = vld [vmem:[#allocation8 + $0x74] sm:$0xf]
    %v374 = vld [vmem:[#allocation8 + $0x78] sm:$0xf]
    %v375 = vld [vmem:[#allocation8 + $0x7c] sm:$0xf]
    %v376 = vld [vmem:[#allocation8 + $0x80] sm:$0xf]
    %v377 = vld [vmem:[#allocation8 + $0x84] sm:$0xf]
    %v378 = vld [vmem:[#allocation8 + $0x88] sm:$0xf]
    %v379 = vld [vmem:[#allocation8 + $0x8c] sm:$0xf]
    %v380 = vld [vmem:[#allocation8 + $0x90] sm:$0xf]
    %v381 = vld [vmem:[#allocation8 + $0x94] sm:$0xf]
    %v382 = vld [vmem:[#allocation8 + $0x98] sm:$0xf]
    %v383 = vld [vmem:[#allocation8 + $0x9c] sm:$0xf]
    %v384 = vld [vmem:[#allocation8 + $0xa0] sm:$0xf]
    %v385 = vld [vmem:[#allocation8 + $0xa4] sm:$0xf]
    %v386 = vld [vmem:[#allocation8 + $0xa8] sm:$0xf]
    %v387 = vld [vmem:[#allocation8 + $0xac] sm:$0xf]
    %v388 = vld [vmem:[#allocation8 + $0xb0] sm:$0xf]
    %v389 = vld [vmem:[#allocation8 + $0xb4] sm:$0xf]
    %v390 = vld [vmem:[#allocation8 + $0xb8] sm:$0xf]
    %v391 = vld [vmem:[#allocation8 + $0xbc] sm:$0xf]
    %v392 = vld [vmem:[%s6] sm:$0x1]
    %v394 = vlaneseq
    %v395 = vshrl.u32 %v394, 7
    %v396 = vsub.s32 0, %v395
    %v397 = vrot.slane %v392, %v396
    %v447 = vunpack.c.l.b16 %v344
    %v448 = vunpack.c.l.b16 %v345
    %v449 = vunpack.c.l.b16 %v346
    %v450 = vunpack.c.l.b16 %v347
    %v451 = vunpack.c.l.b16 %v348
    %v452 = vunpack.c.l.b16 %v349
    %v453 = vunpack.c.l.b16 %v350
    %v454 = vunpack.c.l.b16 %v351
    %v455 = vunpack.c.l.b16 %v352
    %v456 = vunpack.c.l.b16 %v353
    %v457 = vunpack.c.l.b16 %v354
    %v458 = vunpack.c.l.b16 %v355
    %v459 = vunpack.c.l.b16 %v356
    %v460 = vunpack.c.l.b16 %v357
    %v461 = vunpack.c.l.b16 %v358
    %v462 = vunpack.c.l.b16 %v359
    %v463 = vunpack.c.l.b16 %v360
    %v464 = vunpack.c.l.b16 %v361
    %v465 = vunpack.c.l.b16 %v362
    %v466 = vunpack.c.l.b16 %v363
    %v467 = vunpack.c.l.b16 %v364
    %v468 = vunpack.c.l.b16 %v365
    %v469 = vunpack.c.l.b16 %v366
    %v470 = vunpack.c.l.b16 %v367
    %v471 = vunpack.c.l.b16 %v368
    %v472 = vunpack.c.l.b16 %v369
    %v473 = vunpack.c.l.b16 %v370
    %v474 = vunpack.c.l.b16 %v371
    %v475 = vunpack.c.l.b16 %v372
    %v476 = vunpack.c.l.b16 %v373
    %v477 = vunpack.c.l.b16 %v374
    %v478 = vunpack.c.l.b16 %v375
    %v479 = vunpack.c.l.b16 %v376
    %v480 = vunpack.c.l.b16 %v377
    %v481 = vunpack.c.l.b16 %v378
    %v482 = vunpack.c.l.b16 %v379
    %v483 = vunpack.c.l.b16 %v380
    %v484 = vunpack.c.l.b16 %v381
    %v485 = vunpack.c.l.b16 %v382
    %v486 = vunpack.c.l.b16 %v383
    %v487 = vunpack.c.l.b16 %v384
    %v488 = vunpack.c.l.b16 %v385
    %v489 = vunpack.c.l.b16 %v386
    %v490 = vunpack.c.l.b16 %v387
    %v491 = vunpack.c.l.b16 %v388
    %v492 = vunpack.c.l.b16 %v389
    %v493 = vunpack.c.l.b16 %v390
    %v494 = vunpack.c.l.b16 %v391
    %v495 = vpack.c.b16 %v448, %v447
    %v496 = vpack.c.b16 %v450, %v449
    %v497 = vpack.c.b16 %v452, %v451
    %v498 = vpack.c.b16 %v454, %v453
    %v499 = vpack.c.b16 %v456, %v455
    %v500 = vpack.c.b16 %v458, %v457
    %v501 = vpack.c.b16 %v460, %v459
    %v502 = vpack.c.b16 %v462, %v461
    %v503 = vpack.c.b16 %v464, %v463
    %v504 = vpack.c.b16 %v466, %v465
    %v505 = vpack.c.b16 %v468, %v467
    %v506 = vpack.c.b16 %v470, %v469
    %v507 = vpack.c.b16 %v472, %v471
    %v508 = vpack.c.b16 %v474, %v473
    %v509 = vpack.c.b16 %v476, %v475
    %v510 = vpack.c.b16 %v478, %v477
    %v511 = vpack.c.b16 %v480, %v479
    %v512 = vpack.c.b16 %v482, %v481
    %v513 = vpack.c.b16 %v484, %v483
    %v514 = vpack.c.b16 %v486, %v485
    %v515 = vpack.c.b16 %v488, %v487
    %v516 = vpack.c.b16 %v490, %v489
    %v517 = vpack.c.b16 %v492, %v491
    %v518 = vpack.c.b16 %v494, %v493
    %543 = vmatprep.subr.bf16.mxu0 0
    %544 = vmatpush1.bf16.msra.mxu0 %v495
    %545 = vmatprep.subr.bf16.mxu0 0
    %546 = vmatpush1.bf16.msra.mxu0 %v496
    %547 = vmatprep.subr.bf16.mxu0 0
    %548 = vmatpush1.bf16.msra.mxu0 %v497
    %549 = vmatprep.subr.bf16.mxu0 0
    %550 = vmatpush1.bf16.msra.mxu0 %v498
    %551 = vmatprep.subr.bf16.mxu0 0
    %552 = vmatpush1.bf16.msra.mxu0 %v499
    %553 = vmatprep.subr.bf16.mxu0 0
    %554 = vmatpush1.bf16.msra.mxu0 %v500
    %555 = vmatprep.subr.bf16.mxu0 0
    %556 = vmatpush1.bf16.msra.mxu0 %v501
    %557 = vmatprep.subr.bf16.mxu0 0
    %558 = vmatpush1.bf16.msra.mxu0 %v502
    %559 = vmatprep.subr.bf16.mxu0 0
    %560 = vmatpush1.bf16.msra.mxu0 %v503
    %561 = vmatprep.subr.bf16.mxu0 0
    %562 = vmatpush1.bf16.msra.mxu0 %v504
    %563 = vmatprep.subr.bf16.mxu0 0
    %564 = vmatpush1.bf16.msra.mxu0 %v505
    %565 = vmatprep.subr.bf16.mxu0 0
    %566 = vmatpush1.bf16.msra.mxu0 %v506
    %567 = vmatprep.subr.bf16.mxu0 0
    %568 = vmatpush1.bf16.msra.mxu0 %v507
    %569 = vmatprep.subr.bf16.mxu0 0
    %570 = vmatpush1.bf16.msra.mxu0 %v508
    %571 = vmatprep.subr.bf16.mxu0 0
    %572 = vmatpush1.bf16.msra.mxu0 %v509
    %573 = vmatprep.subr.bf16.mxu0 0
    %574 = vmatpush1.bf16.msra.mxu0 %v510
    %575 = vmatprep.mubr.bf16.mxu0 %v340
    %576 = vmatmul.mubr.bf16.gmra.mrb[0].mxu0 %v336
    %v577 = vpop.f32.mrb[0].mxu0
    %v578 = vadd.f32 %v397, %v577
    %v579 = vpop.f32.mrb[0].mxu0
    %v580 = vpop.f32.mrb[0].mxu0
    %v581 = vadd.f32 %v397, %v580
    %v582 = vpop.f32.mrb[0].mxu0
    %583 = vmatprep.mubr.bf16.mxu0 %v341
    %584 = vmatmul.mubr.bf16.gmra.mrb[0].mxu0 %v337
    %v585 = vpop.f32.mrb[0].mxu0
    %v586 = vadd.f32 %v397, %v585
    %v587 = vpop.f32.mrb[0].mxu0
    %v588 = vpop.f32.mrb[0].mxu0
    %v589 = vadd.f32 %v397, %v588
    %v590 = vpop.f32.mrb[0].mxu0
    %591 = vmatprep.mubr.bf16.mxu0 %v342
    %592 = vmatmul.mubr.bf16.gmra.mrb[0].mxu0 %v338
    %v593 = vpop.f32.mrb[0].mxu0
    %v594 = vadd.f32 %v397, %v593
    %v595 = vpop.f32.mrb[0].mxu0
    %v596 = vpop.f32.mrb[0].mxu0
    %v597 = vadd.f32 %v397, %v596
    %v598 = vpop.f32.mrb[0].mxu0
    %599 = vmatprep.mubr.bf16.mxu0 %v343
    %600 = vmatmul.mubr.bf16.gmra.mrb[0].mxu0 %v339
    %v601 = vpop.f32.mrb[0].mxu0
    %v602 = vadd.f32 %v397, %v601
    %v603 = vpop.f32.mrb[0].mxu0
    %v604 = vpop.f32.mrb[0].mxu0
    %v605 = vadd.f32 %v397, %v604
    %v606 = vpop.f32.mrb[0].mxu0
    %607 = vdwg.mxu0
    %608 = vmatprep.subr.bf16.mxu0 0
    %609 = vmatpush1.bf16.msra.mxu0 %v511
    %610 = vmatprep.subr.bf16.mxu0 0
    %611 = vmatpush1.bf16.msra.mxu0 %v512
    %612 = vmatprep.subr.bf16.mxu0 0
    %613 = vmatpush1.bf16.msra.mxu0 %v513
    %614 = vmatprep.subr.bf16.mxu0 0
    %615 = vmatpush1.bf16.msra.mxu0 %v514
    %616 = vmatprep.subr.bf16.mxu0 0
    %617 = vmatpush1.bf16.msra.mxu0 %v515
    %618 = vmatprep.subr.bf16.mxu0 0
    %619 = vmatpush1.bf16.msra.mxu0 %v516
    %620 = vmatprep.subr.bf16.mxu0 0
    %621 = vmatpush1.bf16.msra.mxu0 %v517
    %622 = vmatprep.subr.bf16.mxu0 0
    %623 = vmatpush1.bf16.msra.mxu0 %v518
    %624 = vmatprep.subr.bf16.mxu0 0
    %625 = vmatpush1.bf16.msra.mxu0 0
    %626 = vmatprep.subr.bf16.mxu0 0
    %627 = vmatpush1.bf16.msra.mxu0 0
    %628 = vmatprep.subr.bf16.mxu0 0
    %629 = vmatpush1.bf16.msra.mxu0 0
    %630 = vmatprep.subr.bf16.mxu0 0
    %631 = vmatpush1.bf16.msra.mxu0 0
    %632 = vmatprep.subr.bf16.mxu0 0
    %633 = vmatpush1.bf16.msra.mxu0 0
    %634 = vmatprep.subr.bf16.mxu0 0
    %635 = vmatpush1.bf16.msra.mxu0 0
    %636 = vmatprep.subr.bf16.mxu0 0
    %637 = vmatpush1.bf16.msra.mxu0 0
    %638 = vmatprep.subr.bf16.mxu0 0
    %639 = vmatpush1.bf16.msra.mxu0 0
    %640 = vmatprep.mubr.bf16.mxu0 0
    %641 = vmatmul.mubr.bf16.gmra.mrb[0].mxu0 %v137
    %v642 = vpop.f32.mrb[0].mxu0
    %v643 = vadd.f32 %v578, %v642
    %v644 = vpop.f32.mrb[0].mxu0
    %v645 = vpop.f32.mrb[0].mxu0
    %v646 = vadd.f32 %v581, %v645
    %v647 = vpop.f32.mrb[0].mxu0
    %648 = vmatprep.mubr.bf16.mxu0 0
    %649 = vmatmul.mubr.bf16.gmra.mrb[0].mxu0 %v138
    %v650 = vpop.f32.mrb[0].mxu0
    %v651 = vadd.f32 %v586, %v650
    %v652 = vpop.f32.mrb[0].mxu0
    %v653 = vpop.f32.mrb[0].mxu0
    %v654 = vadd.f32 %v589, %v653
    %v655 = vpop.f32.mrb[0].mxu0
    %656 = vmatprep.mubr.bf16.mxu0 0
    %657 = vmatmul.mubr.bf16.gmra.mrb[0].mxu0 %v139
    %v658 = vpop.f32.mrb[0].mxu0
    %v659 = vadd.f32 %v594, %v658
    %v660 = vpop.f32.mrb[0].mxu0
    %v661 = vpop.f32.mrb[0].mxu0
    %v662 = vadd.f32 %v597, %v661
    %v663 = vpop.f32.mrb[0].mxu0
    %664 = vmatprep.mubr.bf16.mxu0 0
    %665 = vmatmul.mubr.bf16.gmra.mrb[0].mxu0 %v140
    %v666 = vpop.f32.mrb[0].mxu0
    %v667 = vadd.f32 %v602, %v666
    %v668 = vpop.f32.mrb[0].mxu0
    %v669 = vpop.f32.mrb[0].mxu0
    %v670 = vadd.f32 %v605, %v669
    %v671 = vpop.f32.mrb[0].mxu0
    %672 = vdwg.mxu0
    %v673 = vmax.f32 %v643, 0.0
    %v674 = vmax.f32 %v646, 0.0
    %v675 = vmax.f32 %v651, 0.0
    %v676 = vmax.f32 %v654, 0.0
    %v677 = vmax.f32 %v659, 0.0
    %v678 = vmax.f32 %v662, 0.0
    %v679 = vmax.f32 %v667, 0.0
    %v680 = vmax.f32 %v670, 0.0
    %v681 = vpack.c.bf16 %v674, %v673
    %v682 = vpack.c.bf16 %v676, %v675
    %v683 = vpack.c.bf16 %v678, %v677
    %v684 = vpack.c.bf16 %v680, %v679
    %685 = vmatprep.subr.bf16.mxu0 0
    %686 = vmatpush1.bf16.msra.mxu0 %v681
    %687 = vmatprep.subr.bf16.mxu0 0
    %688 = vmatpush1.bf16.msra.mxu0 %v682
    %689 = vmatprep.subr.bf16.mxu0 0
    %690 = vmatpush1.bf16.msra.mxu0 %v683
    %691 = vmatprep.subr.bf16.mxu0 0
    %692 = vmatpush1.bf16.msra.mxu0 %v684
    %693 = vmatprep.subr.bf16.mxu0 0
    %694 = vmatpush1.bf16.msra.mxu0 0
    %695 = vmatprep.subr.bf16.mxu0 0
    %696 = vmatpush1.bf16.msra.mxu0 0
    %697 = vmatprep.subr.bf16.mxu0 0
    %698 = vmatpush1.bf16.msra.mxu0 0
    %699 = vmatprep.subr.bf16.mxu0 0
    %700 = vmatpush1.bf16.msra.mxu0 0
    %701 = vmatprep.subr.bf16.mxu0 0
    %702 = vmatpush1.bf16.msra.mxu0 0
    %703 = vmatprep.subr.bf16.mxu0 0
    %704 = vmatpush1.bf16.msra.mxu0 0
    %705 = vmatprep.subr.bf16.mxu0 0
    %706 = vmatpush1.bf16.msra.mxu0 0
    %707 = vmatprep.subr.bf16.mxu0 0
    %708 = vmatpush1.bf16.msra.mxu0 0
    %709 = vmatprep.subr.bf16.mxu0 0
    %710 = vmatpush1.bf16.msra.mxu0 0
    %711 = vmatprep.subr.bf16.mxu0 0
    %712 = vmatpush1.bf16.msra.mxu0 0
    %713 = vmatprep.subr.bf16.mxu0 0
    %714 = vmatpush1.bf16.msra.mxu0 0
    %715 = vmatprep.subr.bf16.mxu0 0
    %716 = vmatpush1.bf16.msra.mxu0 0
    %717 = vmatprep.mubr.bf16.mxu0 0
    %718 = vmatmul.mubr.bf16.gmra.mrb[0].mxu0 %v163
    %v719 = vpop.f32.mrb[0].mxu0
    %v720 = vadd.f32 0.0, %v719
    %v721 = vpop.f32.mrb[0].mxu0
    %v722 = vpop.f32.mrb[0].mxu0
    %v723 = vadd.f32 0.0, %v722
    %v724 = vpop.f32.mrb[0].mxu0
    %725 = vmatprep.mubr.bf16.mxu0 0
    %726 = vmatmul.mubr.bf16.gmra.mrb[0].mxu0 %v166
    %v727 = vpop.f32.mrb[0].mxu0
    %v728 = vadd.f32 0.0, %v727
    %v729 = vpop.f32.mrb[0].mxu0
    %v730 = vpop.f32.mrb[0].mxu0
    %v731 = vadd.f32 0.0, %v730
    %v732 = vpop.f32.mrb[0].mxu0
    %733 = vmatprep.mubr.bf16.mxu0 0
    %734 = vmatmul.mubr.bf16.gmra.mrb[0].mxu0 %v169
    %v735 = vpop.f32.mrb[0].mxu0
    %v736 = vadd.f32 0.0, %v735
    %v737 = vpop.f32.mrb[0].mxu0
    %v738 = vpop.f32.mrb[0].mxu0
    %v739 = vadd.f32 0.0, %v738
    %v740 = vpop.f32.mrb[0].mxu0
    %741 = vmatprep.mubr.bf16.mxu0 0
    %742 = vmatmul.mubr.bf16.gmra.mrb[0].mxu0 %v172
    %v743 = vpop.f32.mrb[0].mxu0
    %v744 = vadd.f32 0.0, %v743
    %v745 = vpop.f32.mrb[0].mxu0
    %v746 = vpop.f32.mrb[0].mxu0
    %v747 = vadd.f32 0.0, %v746
    %v748 = vpop.f32.mrb[0].mxu0
    %749 = vdwg.mxu0
    %750 = vmatprep.subr.bf16.mxu0 0
    %751 = vmatpush1.bf16.msra.mxu0 %v681
    %752 = vmatprep.subr.bf16.mxu0 0
    %753 = vmatpush1.bf16.msra.mxu0 %v682
    %754 = vmatprep.subr.bf16.mxu0 0
    %755 = vmatpush1.bf16.msra.mxu0 %v683
    %756 = vmatprep.subr.bf16.mxu0 0
    %757 = vmatpush1.bf16.msra.mxu0 %v684
    %758 = vmatprep.subr.bf16.mxu0 0
    %759 = vmatpush1.bf16.msra.mxu0 0
    %760 = vmatprep.subr.bf16.mxu0 0
    %761 = vmatpush1.bf16.msra.mxu0 0
    %762 = vmatprep.subr.bf16.mxu0 0
    %763 = vmatpush1.bf16.msra.mxu0 0
    %764 = vmatprep.subr.bf16.mxu0 0
    %765 = vmatpush1.bf16.msra.mxu0 0
    %766 = vmatprep.subr.bf16.mxu0 0
    %767 = vmatpush1.bf16.msra.mxu0 0
    %768 = vmatprep.subr.bf16.mxu0 0
    %769 = vmatpush1.bf16.msra.mxu0 0
    %770 = vmatprep.subr.bf16.mxu0 0
    %771 = vmatpush1.bf16.msra.mxu0 0
    %772 = vmatprep.subr.bf16.mxu0 0
    %773 = vmatpush1.bf16.msra.mxu0 0
    %774 = vmatprep.subr.bf16.mxu0 0
    %775 = vmatpush1.bf16.msra.mxu0 0
    %776 = vmatprep.subr.bf16.mxu0 0
    %777 = vmatpush1.bf16.msra.mxu0 0
    %778 = vmatprep.subr.bf16.mxu0 0
    %779 = vmatpush1.bf16.msra.mxu0 0
    %780 = vmatprep.subr.bf16.mxu0 0
    %781 = vmatpush1.bf16.msra.mxu0 0
    %782 = vmatprep.mubr.bf16.mxu0 0
    %783 = vmatmul.mubr.bf16.gmra.mrb[0].mxu0 %v260
    %v784 = vpop.f32.mrb[0].mxu0
    %v785 = vadd.f32 0.0, %v784
    %v786 = vpop.f32.mrb[0].mxu0
    %v787 = vpop.f32.mrb[0].mxu0
    %v788 = vadd.f32 0.0, %v787
    %v789 = vpop.f32.mrb[0].mxu0
    %790 = vmatprep.mubr.bf16.mxu0 0
    %791 = vmatmul.mubr.bf16.gmra.mrb[0].mxu0 %v263
    %v792 = vpop.f32.mrb[0].mxu0
    %v793 = vadd.f32 0.0, %v792
    %v794 = vpop.f32.mrb[0].mxu0
    %v795 = vpop.f32.mrb[0].mxu0
    %v796 = vadd.f32 0.0, %v795
    %v797 = vpop.f32.mrb[0].mxu0
    %798 = vmatprep.mubr.bf16.mxu0 0
    %799 = vmatmul.mubr.bf16.gmra.mrb[0].mxu0 %v266
    %v800 = vpop.f32.mrb[0].mxu0
    %v801 = vadd.f32 0.0, %v800
    %v802 = vpop.f32.mrb[0].mxu0
    %v803 = vpop.f32.mrb[0].mxu0
    %v804 = vadd.f32 0.0, %v803
    %v805 = vpop.f32.mrb[0].mxu0
    %806 = vmatprep.mubr.bf16.mxu0 0
    %807 = vmatmul.mubr.bf16.gmra.mrb[0].mxu0 %v269
    %v808 = vpop.f32.mrb[0].mxu0
    %v809 = vadd.f32 0.0, %v808
    %v810 = vpop.f32.mrb[0].mxu0
    %v811 = vpop.f32.mrb[0].mxu0
    %v812 = vadd.f32 0.0, %v811
    %v813 = vpop.f32.mrb[0].mxu0
    %814 = vdwg.mxu0
    %v815 = vpack.c.bf16 %v723, %v720
    %v816 = vpack.c.bf16 %v731, %v728
    %v817 = vpack.c.bf16 %v739, %v736
    %v818 = vpack.c.bf16 %v747, %v744
    %v819 = vpack.c.bf16 %v788, %v785
    %v820 = vpack.c.bf16 %v796, %v793
    %v821 = vpack.c.bf16 %v804, %v801
    %v822 = vpack.c.bf16 %v812, %v809
    %s823 = scalar_lea.vmem [#allocation8], 192
    %v824 = vld [vmem:[%s823] sm:$0xf]
    %v825 = vld [vmem:[%s823 + $0x4] sm:$0xf]
    %v826 = vld [vmem:[%s823 + $0x8] sm:$0xf]
    %v827 = vld [vmem:[%s823 + $0xc] sm:$0xf]
    %v828 = vld [vmem:[%s823 + $0x10] sm:$0xf]
    %v829 = vld [vmem:[%s823 + $0x14] sm:$0xf]
    %v830 = vld [vmem:[%s823 + $0x18] sm:$0xf]
    %v831 = vld [vmem:[%s823 + $0x1c] sm:$0xf]
    %v832 = vld [vmem:[%s823 + $0x20] sm:$0xf]
    %v833 = vld [vmem:[%s823 + $0x24] sm:$0xf]
    %v834 = vld [vmem:[%s823 + $0x28] sm:$0xf]
    %v835 = vld [vmem:[%s823 + $0x2c] sm:$0xf]
    %v836 = vld [vmem:[%s823 + $0x30] sm:$0xf]
    %v837 = vld [vmem:[%s823 + $0x34] sm:$0xf]
    %v838 = vld [vmem:[%s823 + $0x38] sm:$0xf]
    %v839 = vld [vmem:[%s823 + $0x3c] sm:$0xf]
    %v840 = vld [vmem:[%s823 + $0x40] sm:$0xf]
    %v841 = vld [vmem:[%s823 + $0x44] sm:$0xf]
    %v842 = vld [vmem:[%s823 + $0x48] sm:$0xf]
    %v843 = vld [vmem:[%s823 + $0x4c] sm:$0xf]
    %v844 = vld [vmem:[%s823 + $0x50] sm:$0xf]
    %v845 = vld [vmem:[%s823 + $0x54] sm:$0xf]
    %v846 = vld [vmem:[%s823 + $0x58] sm:$0xf]
    %v847 = vld [vmem:[%s823 + $0x5c] sm:$0xf]
    %v848 = vld [vmem:[%s823 + $0x60] sm:$0xf]
    %v849 = vld [vmem:[%s823 + $0x64] sm:$0xf]
    %v850 = vld [vmem:[%s823 + $0x68] sm:$0xf]
    %v851 = vld [vmem:[%s823 + $0x6c] sm:$0xf]
    %v852 = vld [vmem:[%s823 + $0x70] sm:$0xf]
    %v853 = vld [vmem:[%s823 + $0x74] sm:$0xf]
    %v854 = vld [vmem:[%s823 + $0x78] sm:$0xf]
    %v855 = vld [vmem:[%s823 + $0x7c] sm:$0xf]
    %v856 = vld [vmem:[%s823 + $0x80] sm:$0xf]
    %v857 = vld [vmem:[%s823 + $0x84] sm:$0xf]
    %v858 = vld [vmem:[%s823 + $0x88] sm:$0xf]
    %v859 = vld [vmem:[%s823 + $0x8c] sm:$0xf]
    %v860 = vld [vmem:[%s823 + $0x90] sm:$0xf]
    %v861 = vld [vmem:[%s823 + $0x94] sm:$0xf]
    %v862 = vld [vmem:[%s823 + $0x98] sm:$0xf]
    %v863 = vld [vmem:[%s823 + $0x9c] sm:$0xf]
    %v864 = vld [vmem:[%s823 + $0xa0] sm:$0xf]
    %v865 = vld [vmem:[%s823 + $0xa4] sm:$0xf]
    %v866 = vld [vmem:[%s823 + $0xa8] sm:$0xf]
    %v867 = vld [vmem:[%s823 + $0xac] sm:$0xf]
    %v868 = vld [vmem:[%s823 + $0xb0] sm:$0xf]
    %v869 = vld [vmem:[%s823 + $0xb4] sm:$0xf]
    %v870 = vld [vmem:[%s823 + $0xb8] sm:$0xf]
    %v871 = vld [vmem:[%s823 + $0xbc] sm:$0xf]
    %s872 = scalar_lea.vmem %s6, 1
    %v873 = vld [vmem:[%s872] sm:$0x1]
    %v875 = vlaneseq
    %v876 = vshrl.u32 %v875, 7
    %v877 = vsub.s32 0, %v876
    %v878 = vrot.slane %v873, %v877
    %v928 = vunpack.c.l.b16 %v824
    %v929 = vunpack.c.l.b16 %v825
    %v930 = vunpack.c.l.b16 %v826
    %v931 = vunpack.c.l.b16 %v827
    %v932 = vunpack.c.l.b16 %v828
    %v933 = vunpack.c.l.b16 %v829
    %v934 = vunpack.c.l.b16 %v830
    %v935 = vunpack.c.l.b16 %v831
    %v936 = vunpack.c.l.b16 %v832
    %v937 = vunpack.c.l.b16 %v833
    %v938 = vunpack.c.l.b16 %v834
    %v939 = vunpack.c.l.b16 %v835
    %v940 = vunpack.c.l.b16 %v836
    %v941 = vunpack.c.l.b16 %v837
    %v942 = vunpack.c.l.b16 %v838
    %v943 = vunpack.c.l.b16 %v839
    %v944 = vunpack.c.l.b16 %v840
    %v945 = vunpack.c.l.b16 %v841
    %v946 = vunpack.c.l.b16 %v842
    %v947 = vunpack.c.l.b16 %v843
    %v948 = vunpack.c.l.b16 %v844
    %v949 = vunpack.c.l.b16 %v845
    %v950 = vunpack.c.l.b16 %v846
    %v951 = vunpack.c.l.b16 %v847
    %v952 = vunpack.c.l.b16 %v848
    %v953 = vunpack.c.l.b16 %v849
    %v954 = vunpack.c.l.b16 %v850
    %v955 = vunpack.c.l.b16 %v851
    %v956 = vunpack.c.l.b16 %v852
    %v957 = vunpack.c.l.b16 %v853
    %v958 = vunpack.c.l.b16 %v854
    %v959 = vunpack.c.l.b16 %v855
    %v960 = vunpack.c.l.b16 %v856
    %v961 = vunpack.c.l.b16 %v857
    %v962 = vunpack.c.l.b16 %v858
    %v963 = vunpack.c.l.b16 %v859
    %v964 = vunpack.c.l.b16 %v860
    %v965 = vunpack.c.l.b16 %v861
    %v966 = vunpack.c.l.b16 %v862
    %v967 = vunpack.c.l.b16 %v863
    %v968 = vunpack.c.l.b16 %v864
    %v969 = vunpack.c.l.b16 %v865
    %v970 = vunpack.c.l.b16 %v866
    %v971 = vunpack.c.l.b16 %v867
    %v972 = vunpack.c.l.b16 %v868
    %v973 = vunpack.c.l.b16 %v869
    %v974 = vunpack.c.l.b16 %v870
    %v975 = vunpack.c.l.b16 %v871
    %v976 = vpack.c.b16 %v929, %v928
    %v977 = vpack.c.b16 %v931, %v930
    %v978 = vpack.c.b16 %v933, %v932
    %v979 = vpack.c.b16 %v935, %v934
    %v980 = vpack.c.b16 %v937, %v936
    %v981 = vpack.c.b16 %v939, %v938
    %v982 = vpack.c.b16 %v941, %v940
    %v983 = vpack.c.b16 %v943, %v942
    %v984 = vpack.c.b16 %v945, %v944
    %v985 = vpack.c.b16 %v947, %v946
    %v986 = vpack.c.b16 %v949, %v948
    %v987 = vpack.c.b16 %v951, %v950
    %v988 = vpack.c.b16 %v953, %v952
    %v989 = vpack.c.b16 %v955, %v954
    %v990 = vpack.c.b16 %v957, %v956
    %v991 = vpack.c.b16 %v959, %v958
    %v992 = vpack.c.b16 %v961, %v960
    %v993 = vpack.c.b16 %v963, %v962
    %v994 = vpack.c.b16 %v965, %v964
    %v995 = vpack.c.b16 %v967, %v966
    %v996 = vpack.c.b16 %v969, %v968
    %v997 = vpack.c.b16 %v971, %v970
    %v998 = vpack.c.b16 %v973, %v972
    %v999 = vpack.c.b16 %v975, %v974
    %1024 = vmatprep.subr.bf16.mxu0 0
    %1025 = vmatpush1.bf16.msra.mxu0 %v976
    %1026 = vmatprep.subr.bf16.mxu0 0
    %1027 = vmatpush1.bf16.msra.mxu0 %v977
    %1028 = vmatprep.subr.bf16.mxu0 0
    %1029 = vmatpush1.bf16.msra.mxu0 %v978
    %1030 = vmatprep.subr.bf16.mxu0 0
    %1031 = vmatpush1.bf16.msra.mxu0 %v979
    %1032 = vmatprep.subr.bf16.mxu0 0
    %1033 = vmatpush1.bf16.msra.mxu0 %v980
    %1034 = vmatprep.subr.bf16.mxu0 0
    %1035 = vmatpush1.bf16.msra.mxu0 %v981
    %1036 = vmatprep.subr.bf16.mxu0 0
    %1037 = vmatpush1.bf16.msra.mxu0 %v982
    %1038 = vmatprep.subr.bf16.mxu0 0
    %1039 = vmatpush1.bf16.msra.mxu0 %v983
    %1040 = vmatprep.subr.bf16.mxu0 0
    %1041 = vmatpush1.bf16.msra.mxu0 %v984
    %1042 = vmatprep.subr.bf16.mxu0 0
    %1043 = vmatpush1.bf16.msra.mxu0 %v985
    %1044 = vmatprep.subr.bf16.mxu0 0
    %1045 = vmatpush1.bf16.msra.mxu0 %v986
    %1046 = vmatprep.subr.bf16.mxu0 0
    %1047 = vmatpush1.bf16.msra.mxu0 %v987
    %1048 = vmatprep.subr.bf16.mxu0 0
    %1049 = vmatpush1.bf16.msra.mxu0 %v988
    %1050 = vmatprep.subr.bf16.mxu0 0
    %1051 = vmatpush1.bf16.msra.mxu0 %v989
    %1052 = vmatprep.subr.bf16.mxu0 0
    %1053 = vmatpush1.bf16.msra.mxu0 %v990
    %1054 = vmatprep.subr.bf16.mxu0 0
    %1055 = vmatpush1.bf16.msra.mxu0 %v991
    %1056 = vmatprep.mubr.bf16.mxu0 %v819
    %1057 = vmatmul.mubr.bf16.gmra.mrb[0].mxu0 %v815
    %v1058 = vpop.f32.mrb[0].mxu0
    %v1059 = vadd.f32 %v878, %v1058
    %v1060 = vpop.f32.mrb[0].mxu0
    %v1061 = vpop.f32.mrb[0].mxu0
    %v1062 = vadd.f32 %v878, %v1061
    %v1063 = vpop.f32.mrb[0].mxu0
    %1064 = vmatprep.mubr.bf16.mxu0 %v820
    %1065 = vmatmul.mubr.bf16.gmra.mrb[0].mxu0 %v816
    %v1066 = vpop.f32.mrb[0].mxu0
    %v1067 = vadd.f32 %v878, %v1066
    %v1068 = vpop.f32.mrb[0].mxu0
    %v1069 = vpop.f32.mrb[0].mxu0
    %v1070 = vadd.f32 %v878, %v1069
    %v1071 = vpop.f32.mrb[0].mxu0
    %1072 = vmatprep.mubr.bf16.mxu0 %v821
    %1073 = vmatmul.mubr.bf16.gmra.mrb[0].mxu0 %v817
    %v1074 = vpop.f32.mrb[0].mxu0
    %v1075 = vadd.f32 %v878, %v1074
    %v1076 = vpop.f32.mrb[0].mxu0
    %v1077 = vpop.f32.mrb[0].mxu0
    %v1078 = vadd.f32 %v878, %v1077
    %v1079 = vpop.f32.mrb[0].mxu0
    %1080 = vmatprep.mubr.bf16.mxu0 %v822
    %1081 = vmatmul.mubr.bf16.gmra.mrb[0].mxu0 %v818
    %v1082 = vpop.f32.mrb[0].mxu0
    %v1083 = vadd.f32 %v878, %v1082
    %v1084 = vpop.f32.mrb[0].mxu0
    %v1085 = vpop.f32.mrb[0].mxu0
    %v1086 = vadd.f32 %v878, %v1085
    %v1087 = vpop.f32.mrb[0].mxu0
    %1088 = vdwg.mxu0
    %1089 = vmatprep.subr.bf16.mxu0 0
    %1090 = vmatpush1.bf16.msra.mxu0 %v992
    %1091 = vmatprep.subr.bf16.mxu0 0
    %1092 = vmatpush1.bf16.msra.mxu0 %v993
    %1093 = vmatprep.subr.bf16.mxu0 0
    %1094 = vmatpush1.bf16.msra.mxu0 %v994
    %1095 = vmatprep.subr.bf16.mxu0 0
    %1096 = vmatpush1.bf16.msra.mxu0 %v995
    %1097 = vmatprep.subr.bf16.mxu0 0
    %1098 = vmatpush1.bf16.msra.mxu0 %v996
    %1099 = vmatprep.subr.bf16.mxu0 0
    %1100 = vmatpush1.bf16.msra.mxu0 %v997
    %1101 = vmatprep.subr.bf16.mxu0 0
    %1102 = vmatpush1.bf16.msra.mxu0 %v998
    %1103 = vmatprep.subr.bf16.mxu0 0
    %1104 = vmatpush1.bf16.msra.mxu0 %v999
    %1105 = vmatprep.subr.bf16.mxu0 0
    %1106 = vmatpush1.bf16.msra.mxu0 0
    %1107 = vmatprep.subr.bf16.mxu0 0
    %1108 = vmatpush1.bf16.msra.mxu0 0
    %1109 = vmatprep.subr.bf16.mxu0 0
    %1110 = vmatpush1.bf16.msra.mxu0 0
    %1111 = vmatprep.subr.bf16.mxu0 0
    %1112 = vmatpush1.bf16.msra.mxu0 0
    %1113 = vmatprep.subr.bf16.mxu0 0
    %1114 = vmatpush1.bf16.msra.mxu0 0
    %1115 = vmatprep.subr.bf16.mxu0 0
    %1116 = vmatpush1.bf16.msra.mxu0 0
    %1117 = vmatprep.subr.bf16.mxu0 0
    %1118 = vmatpush1.bf16.msra.mxu0 0
    %1119 = vmatprep.subr.bf16.mxu0 0
    %1120 = vmatpush1.bf16.msra.mxu0 0
    %1121 = vmatprep.mubr.bf16.mxu0 0
    %1122 = vmatmul.mubr.bf16.gmra.mrb[0].mxu0 %v681
    %v1123 = vpop.f32.mrb[0].mxu0
    %v1124 = vadd.f32 %v1059, %v1123
    %v1125 = vpop.f32.mrb[0].mxu0
    %v1126 = vpop.f32.mrb[0].mxu0
    %v1127 = vadd.f32 %v1062, %v1126
    %v1128 = vpop.f32.mrb[0].mxu0
    %1129 = vmatprep.mubr.bf16.mxu0 0
    %1130 = vmatmul.mubr.bf16.gmra.mrb[0].mxu0 %v682
    %v1131 = vpop.f32.mrb[0].mxu0
    %v1132 = vadd.f32 %v1067, %v1131
    %v1133 = vpop.f32.mrb[0].mxu0
    %v1134 = vpop.f32.mrb[0].mxu0
    %v1135 = vadd.f32 %v1070, %v1134
    %v1136 = vpop.f32.mrb[0].mxu0
    %1137 = vmatprep.mubr.bf16.mxu0 0
    %1138 = vmatmul.mubr.bf16.gmra.mrb[0].mxu0 %v683
    %v1139 = vpop.f32.mrb[0].mxu0
    %v1140 = vadd.f32 %v1075, %v1139
    %v1141 = vpop.f32.mrb[0].mxu0
    %v1142 = vpop.f32.mrb[0].mxu0
    %v1143 = vadd.f32 %v1078, %v1142
    %v1144 = vpop.f32.mrb[0].mxu0
    %1145 = vmatprep.mubr.bf16.mxu0 0
    %1146 = vmatmul.mubr.bf16.gmra.mrb[0].mxu0 %v684
    %v1147 = vpop.f32.mrb[0].mxu0
    %v1148 = vadd.f32 %v1083, %v1147
    %v1149 = vpop.f32.mrb[0].mxu0
    %v1150 = vpop.f32.mrb[0].mxu0
    %v1151 = vadd.f32 %v1086, %v1150
    %v1152 = vpop.f32.mrb[0].mxu0
    %1153 = vdwg.mxu0
    %v1154 = vmax.f32 %v1124, 0.0
    %v1155 = vmax.f32 %v1127, 0.0
    %v1156 = vmax.f32 %v1132, 0.0
    %v1157 = vmax.f32 %v1135, 0.0
    %v1158 = vmax.f32 %v1140, 0.0
    %v1159 = vmax.f32 %v1143, 0.0
    %v1160 = vmax.f32 %v1148, 0.0
    %v1161 = vmax.f32 %v1151, 0.0
    %v1162 = vpack.c.bf16 %v1155, %v1154
    %v1163 = vpack.c.bf16 %v1157, %v1156
    %v1164 = vpack.c.bf16 %v1159, %v1158
    %v1165 = vpack.c.bf16 %v1161, %v1160
    %v1166 = vld [vmem:[#allocation10] sm:$0xf]
    %v1167 = vld [vmem:[#allocation10 + $0x4] sm:$0xf]
    %v1168 = vld [vmem:[#allocation10 + $0x8] sm:$0xf]
    %v1169 = vld [vmem:[#allocation10 + $0xc] sm:$0xf]
    %v1170 = vld [vmem:[#allocation10 + $0x10] sm:$0xf]
    %v1171 = vld [vmem:[#allocation10 + $0x14] sm:$0xf]
    %v1172 = vld [vmem:[#allocation10 + $0x18] sm:$0xf]
    %v1173 = vld [vmem:[#allocation10 + $0x1c] sm:$0xf]
    %v1174 = vld [vmem:[#allocation10 + $0x20] sm:$0xf]
    %v1175 = vld [vmem:[#allocation10 + $0x24] sm:$0xf]
    %v1176 = vld [vmem:[#allocation10 + $0x28] sm:$0xf]
    %v1177 = vld [vmem:[#allocation10 + $0x2c] sm:$0xf]
    %v1178 = vld [vmem:[#allocation10 + $0x30] sm:$0xf]
    %v1179 = vld [vmem:[#allocation10 + $0x34] sm:$0xf]
    %v1180 = vld [vmem:[#allocation10 + $0x38] sm:$0xf]
    %v1181 = vld [vmem:[#allocation10 + $0x3c] sm:$0xf]
    %s1182 = scalar_lea.vmem %s6, 2
    %v1183 = vld [vmem:[%s1182] sm:$0x1]
    %v1185 = vlaneseq
    %v1186 = vshrl.u32 %v1185, 7
    %v1187 = vsub.s32 0, %v1186
    %v1188 = vrot.slane %v1183, %v1187
    %v1206 = vunpack.c.l.b16 %v1166
    %v1207 = vunpack.c.l.b16 %v1167
    %v1208 = vunpack.c.l.b16 %v1168
    %v1209 = vunpack.c.l.b16 %v1169
    %v1210 = vunpack.c.l.b16 %v1170
    %v1211 = vunpack.c.l.b16 %v1171
    %v1212 = vunpack.c.l.b16 %v1172
    %v1213 = vunpack.c.l.b16 %v1173
    %v1214 = vunpack.c.l.b16 %v1174
    %v1215 = vunpack.c.l.b16 %v1175
    %v1216 = vunpack.c.l.b16 %v1176
    %v1217 = vunpack.c.l.b16 %v1177
    %v1218 = vunpack.c.l.b16 %v1178
    %v1219 = vunpack.c.l.b16 %v1179
    %v1220 = vunpack.c.l.b16 %v1180
    %v1221 = vunpack.c.l.b16 %v1181
    %v1222 = vpack.c.b16 %v1207, %v1206
    %v1223 = vpack.c.b16 %v1209, %v1208
    %v1224 = vpack.c.b16 %v1211, %v1210
    %v1225 = vpack.c.b16 %v1213, %v1212
    %v1226 = vpack.c.b16 %v1215, %v1214
    %v1227 = vpack.c.b16 %v1217, %v1216
    %v1228 = vpack.c.b16 %v1219, %v1218
    %v1229 = vpack.c.b16 %v1221, %v1220
    %1238 = vmatprep.subr.bf16.mxu0 0
    %1239 = vmatpush1.bf16.msra.mxu0 %v1222
    %1240 = vmatprep.subr.bf16.mxu0 0
    %1241 = vmatpush1.bf16.msra.mxu0 %v1223
    %1242 = vmatprep.subr.bf16.mxu0 0
    %1243 = vmatpush1.bf16.msra.mxu0 %v1224
    %1244 = vmatprep.subr.bf16.mxu0 0
    %1245 = vmatpush1.bf16.msra.mxu0 %v1225
    %1246 = vmatprep.subr.bf16.mxu0 0
    %1247 = vmatpush1.bf16.msra.mxu0 %v1226
    %1248 = vmatprep.subr.bf16.mxu0 0
    %1249 = vmatpush1.bf16.msra.mxu0 %v1227
    %1250 = vmatprep.subr.bf16.mxu0 0
    %1251 = vmatpush1.bf16.msra.mxu0 %v1228
    %1252 = vmatprep.subr.bf16.mxu0 0
    %1253 = vmatpush1.bf16.msra.mxu0 %v1229
    %1254 = vmatprep.subr.bf16.mxu0 0
    %1255 = vmatpush1.bf16.msra.mxu0 0
    %1256 = vmatprep.subr.bf16.mxu0 0
    %1257 = vmatpush1.bf16.msra.mxu0 0
    %1258 = vmatprep.subr.bf16.mxu0 0
    %1259 = vmatpush1.bf16.msra.mxu0 0
    %1260 = vmatprep.subr.bf16.mxu0 0
    %1261 = vmatpush1.bf16.msra.mxu0 0
    %1262 = vmatprep.subr.bf16.mxu0 0
    %1263 = vmatpush1.bf16.msra.mxu0 0
    %1264 = vmatprep.subr.bf16.mxu0 0
    %1265 = vmatpush1.bf16.msra.mxu0 0
    %1266 = vmatprep.subr.bf16.mxu0 0
    %1267 = vmatpush1.bf16.msra.mxu0 0
    %1268 = vmatprep.subr.bf16.mxu0 0
    %1269 = vmatpush1.bf16.msra.mxu0 0
    %1270 = vmatprep.mubr.bf16.mxu0 0
    %1271 = vmatmul.mubr.bf16.gmra.mrb[0].mxu0 %v1162
    %v1272 = vpop.f32.mrb[0].mxu0
    %v1273 = vadd.f32 %v1188, %v1272
    %v1274 = vpop.f32.mrb[0].mxu0
    %v1275 = vpop.f32.mrb[0].mxu0
    %v1276 = vadd.f32 %v1188, %v1275
    %v1277 = vpop.f32.mrb[0].mxu0
    %1278 = vmatprep.mubr.bf16.mxu0 0
    %1279 = vmatmul.mubr.bf16.gmra.mrb[0].mxu0 %v1163
    %v1280 = vpop.f32.mrb[0].mxu0
    %v1281 = vadd.f32 %v1188, %v1280
    %v1282 = vpop.f32.mrb[0].mxu0
    %v1283 = vpop.f32.mrb[0].mxu0
    %v1284 = vadd.f32 %v1188, %v1283
    %v1285 = vpop.f32.mrb[0].mxu0
    %1286 = vmatprep.mubr.bf16.mxu0 0
    %1287 = vmatmul.mubr.bf16.gmra.mrb[0].mxu0 %v1164
    %v1288 = vpop.f32.mrb[0].mxu0
    %v1289 = vadd.f32 %v1188, %v1288
    %v1290 = vpop.f32.mrb[0].mxu0
    %v1291 = vpop.f32.mrb[0].mxu0
    %v1292 = vadd.f32 %v1188, %v1291
    %v1293 = vpop.f32.mrb[0].mxu0
    %1294 = vmatprep.mubr.bf16.mxu0 0
    %1295 = vmatmul.mubr.bf16.gmra.mrb[0].mxu0 %v1165
    %v1296 = vpop.f32.mrb[0].mxu0
    %v1297 = vadd.f32 %v1188, %v1296
    %v1298 = vpop.f32.mrb[0].mxu0
    %v1299 = vpop.f32.mrb[0].mxu0
    %v1300 = vadd.f32 %v1188, %v1299
    %v1301 = vpop.f32.mrb[0].mxu0
    %1302 = vdwg.mxu0
    %v1303 = vmax.f32 %v1273, 0.0
    %v1304 = vmax.f32 %v1276, 0.0
    %v1305 = vmax.f32 %v1281, 0.0
    %v1306 = vmax.f32 %v1284, 0.0
    %v1307 = vmax.f32 %v1289, 0.0
    %v1308 = vmax.f32 %v1292, 0.0
    %v1309 = vmax.f32 %v1297, 0.0
    %v1310 = vmax.f32 %v1300, 0.0
    %v1311 = vpack.c.bf16 %v1304, %v1303
    %v1312 = vpack.c.bf16 %v1306, %v1305
    %v1313 = vpack.c.bf16 %v1308, %v1307
    %v1314 = vpack.c.bf16 %v1310, %v1309
    %s1315 = scalar_lea.vmem [#allocation10], 64
    %v1316 = vld [vmem:[%s1315] sm:$0xf]
    %v1317 = vld [vmem:[%s1315 + $0x4] sm:$0xf]
    %v1318 = vld [vmem:[%s1315 + $0x8] sm:$0xf]
    %v1319 = vld [vmem:[%s1315 + $0xc] sm:$0xf]
    %v1320 = vld [vmem:[%s1315 + $0x10] sm:$0xf]
    %v1321 = vld [vmem:[%s1315 + $0x14] sm:$0xf]
    %v1322 = vld [vmem:[%s1315 + $0x18] sm:$0xf]
    %v1323 = vld [vmem:[%s1315 + $0x1c] sm:$0xf]
    %v1324 = vld [vmem:[%s1315 + $0x20] sm:$0xf]
    %v1325 = vld [vmem:[%s1315 + $0x24] sm:$0xf]
    %v1326 = vld [vmem:[%s1315 + $0x28] sm:$0xf]
    %v1327 = vld [vmem:[%s1315 + $0x2c] sm:$0xf]
    %v1328 = vld [vmem:[%s1315 + $0x30] sm:$0xf]
    %v1329 = vld [vmem:[%s1315 + $0x34] sm:$0xf]
    %v1330 = vld [vmem:[%s1315 + $0x38] sm:$0xf]
    %v1331 = vld [vmem:[%s1315 + $0x3c] sm:$0xf]
    %s1332 = scalar_lea.vmem %s6, 3
    %v1333 = vld [vmem:[%s1332] sm:$0x1]
    %v1335 = vlaneseq
    %v1336 = vshrl.u32 %v1335, 7
    %v1337 = vsub.s32 0, %v1336
    %v1338 = vrot.slane %v1333, %v1337
    %v1356 = vunpack.c.l.b16 %v1316
    %v1357 = vunpack.c.l.b16 %v1317
    %v1358 = vunpack.c.l.b16 %v1318
    %v1359 = vunpack.c.l.b16 %v1319
    %v1360 = vunpack.c.l.b16 %v1320
    %v1361 = vunpack.c.l.b16 %v1321
    %v1362 = vunpack.c.l.b16 %v1322
    %v1363 = vunpack.c.l.b16 %v1323
    %v1364 = vunpack.c.l.b16 %v1324
    %v1365 = vunpack.c.l.b16 %v1325
    %v1366 = vunpack.c.l.b16 %v1326
    %v1367 = vunpack.c.l.b16 %v1327
    %v1368 = vunpack.c.l.b16 %v1328
    %v1369 = vunpack.c.l.b16 %v1329
    %v1370 = vunpack.c.l.b16 %v1330
    %v1371 = vunpack.c.l.b16 %v1331
    %v1372 = vpack.c.b16 %v1357, %v1356
    %v1373 = vpack.c.b16 %v1359, %v1358
    %v1374 = vpack.c.b16 %v1361, %v1360
    %v1375 = vpack.c.b16 %v1363, %v1362
    %v1376 = vpack.c.b16 %v1365, %v1364
    %v1377 = vpack.c.b16 %v1367, %v1366
    %v1378 = vpack.c.b16 %v1369, %v1368
    %v1379 = vpack.c.b16 %v1371, %v1370
    %1388 = vmatprep.subr.bf16.mxu0 0
    %1389 = vmatpush1.bf16.msra.mxu0 %v1372
    %1390 = vmatprep.subr.bf16.mxu0 0
    %1391 = vmatpush1.bf16.msra.mxu0 %v1373
    %1392 = vmatprep.subr.bf16.mxu0 0
    %1393 = vmatpush1.bf16.msra.mxu0 %v1374
    %1394 = vmatprep.subr.bf16.mxu0 0
    %1395 = vmatpush1.bf16.msra.mxu0 %v1375
    %1396 = vmatprep.subr.bf16.mxu0 0
    %1397 = vmatpush1.bf16.msra.mxu0 %v1376
    %1398 = vmatprep.subr.bf16.mxu0 0
    %1399 = vmatpush1.bf16.msra.mxu0 %v1377
    %1400 = vmatprep.subr.bf16.mxu0 0
    %1401 = vmatpush1.bf16.msra.mxu0 %v1378
    %1402 = vmatprep.subr.bf16.mxu0 0
    %1403 = vmatpush1.bf16.msra.mxu0 %v1379
    %1404 = vmatprep.subr.bf16.mxu0 0
    %1405 = vmatpush1.bf16.msra.mxu0 0
    %1406 = vmatprep.subr.bf16.mxu0 0
    %1407 = vmatpush1.bf16.msra.mxu0 0
    %1408 = vmatprep.subr.bf16.mxu0 0
    %1409 = vmatpush1.bf16.msra.mxu0 0
    %1410 = vmatprep.subr.bf16.mxu0 0
    %1411 = vmatpush1.bf16.msra.mxu0 0
    %1412 = vmatprep.subr.bf16.mxu0 0
    %1413 = vmatpush1.bf16.msra.mxu0 0
    %1414 = vmatprep.subr.bf16.mxu0 0
    %1415 = vmatpush1.bf16.msra.mxu0 0
    %1416 = vmatprep.subr.bf16.mxu0 0
    %1417 = vmatpush1.bf16.msra.mxu0 0
    %1418 = vmatprep.subr.bf16.mxu0 0
    %1419 = vmatpush1.bf16.msra.mxu0 0
    %1420 = vmatprep.mubr.bf16.mxu0 0
    %1421 = vmatmul.mubr.bf16.gmra.mrb[0].mxu0 %v1311
    %v1422 = vpop.f32.mrb[0].mxu0
    %v1423 = vadd.f32 %v1338, %v1422
    %v1424 = vpop.f32.mrb[0].mxu0
    %v1425 = vpop.f32.mrb[0].mxu0
    %v1426 = vadd.f32 %v1338, %v1425
    %v1427 = vpop.f32.mrb[0].mxu0
    %1428 = vmatprep.mubr.bf16.mxu0 0
    %1429 = vmatmul.mubr.bf16.gmra.mrb[0].mxu0 %v1312
    %v1430 = vpop.f32.mrb[0].mxu0
    %v1431 = vadd.f32 %v1338, %v1430
    %v1432 = vpop.f32.mrb[0].mxu0
    %v1433 = vpop.f32.mrb[0].mxu0
    %v1434 = vadd.f32 %v1338, %v1433
    %v1435 = vpop.f32.mrb[0].mxu0
    %1436 = vmatprep.mubr.bf16.mxu0 0
    %1437 = vmatmul.mubr.bf16.gmra.mrb[0].mxu0 %v1313
    %v1438 = vpop.f32.mrb[0].mxu0
    %v1439 = vadd.f32 %v1338, %v1438
    %v1440 = vpop.f32.mrb[0].mxu0
    %v1441 = vpop.f32.mrb[0].mxu0
    %v1442 = vadd.f32 %v1338, %v1441
    %v1443 = vpop.f32.mrb[0].mxu0
    %1444 = vmatprep.mubr.bf16.mxu0 0
    %1445 = vmatmul.mubr.bf16.gmra.mrb[0].mxu0 %v1314
    %v1446 = vpop.f32.mrb[0].mxu0
    %v1447 = vadd.f32 %v1338, %v1446
    %v1448 = vpop.f32.mrb[0].mxu0
    %v1449 = vpop.f32.mrb[0].mxu0
    %v1450 = vadd.f32 %v1338, %v1449
    %v1451 = vpop.f32.mrb[0].mxu0
    %1452 = vdwg.mxu0
    %v1453 = vadd.f32 %v1423, %v1426
    %v1454 = vadd.f32 %v1453, %v1431
    %v1455 = vadd.f32 %v1454, %v1434
    %v1456 = vadd.f32 %v1455, %v1439
    %v1457 = vadd.f32 %v1456, %v1442
    %v1458 = vadd.f32 %v1457, %v1447
    %v1459 = vadd.f32 %v1458, %v1450
    %v1460 = vrot.slane %v1459, 4
    %v1461 = vadd.f32 %v1459, %v1460
    %v1462 = vrot.slane %v1461, 2
    %v1463 = vadd.f32 %v1461, %v1462
    %v1464 = vrot.slane %v1463, 1
    %v1465 = vadd.f32 %v1463, %v1464
    %v1466 = vrcp.pop 64.0
    %v1467 = vmul.f32 %v1465, %v1466
    %s1468 = scalar_lea.vmem %s6, 6
    %v1469 = vld [vmem:[%s1468] sm:$0x1]
    %v1470 = vmul.f32 %v1469, %v1467
    %v1472 = vlaneseq
    %v1473 = vshrl.u32 %v1472, 7
    %v1474 = vsub.s32 0, %v1473
    %v1475 = vrot.slane %v1470, %v1474
    %v1477 = vsub.f32 %v1423, %v1475
    %v1478 = vsub.f32 %v1426, %v1475
    %v1479 = vsub.f32 %v1431, %v1475
    %v1480 = vsub.f32 %v1434, %v1475
    %v1481 = vsub.f32 %v1439, %v1475
    %v1482 = vsub.f32 %v1442, %v1475
    %v1483 = vsub.f32 %v1447, %v1475
    %v1484 = vsub.f32 %v1450, %v1475
    %v1485 = vmul.f32 %v1477, %v1477
    %v1486 = vmul.f32 %v1478, %v1478
    %v1487 = vmul.f32 %v1479, %v1479
    %v1488 = vmul.f32 %v1480, %v1480
    %v1489 = vmul.f32 %v1481, %v1481
    %v1490 = vmul.f32 %v1482, %v1482
    %v1491 = vmul.f32 %v1483, %v1483
    %v1492 = vmul.f32 %v1484, %v1484
    %v1493 = vadd.f32 %v1485, %v1486
    %v1494 = vadd.f32 %v1493, %v1487
    %v1495 = vadd.f32 %v1494, %v1488
    %v1496 = vadd.f32 %v1495, %v1489
    %v1497 = vadd.f32 %v1496, %v1490
    %v1498 = vadd.f32 %v1497, %v1491
    %v1499 = vadd.f32 %v1498, %v1492
    %v1500 = vrot.slane %v1499, 4
    %v1501 = vadd.f32 %v1499, %v1500
    %v1502 = vrot.slane %v1501, 2
    %v1503 = vadd.f32 %v1501, %v1502
    %v1504 = vrot.slane %v1503, 1
    %v1505 = vadd.f32 %v1503, %v1504
    %v1506 = vmul.f32 %v1505, %v1466
    %s1507 = scalar_lea.vmem %s6, 4
    %v1508 = vld [vmem:[%s1507] sm:$0x1]
    %v1510 = vlaneseq
    %v1511 = vshrl.u32 %v1510, 7
    %v1512 = vsub.s32 0, %v1511
    %v1513 = vrot.slane %v1508, %v1512
    %v1515 = vmul.f32 %v1513, %v1477
    %v1516 = vmul.f32 %v1513, %v1478
    %v1517 = vmul.f32 %v1513, %v1479
    %v1518 = vmul.f32 %v1513, %v1480
    %v1519 = vmul.f32 %v1513, %v1481
    %v1520 = vmul.f32 %v1513, %v1482
    %v1521 = vmul.f32 %v1513, %v1483
    %v1522 = vmul.f32 %v1513, %v1484
    %v1523 = vadd.f32 %v1506, 1e-05
    %v1524 = vrsqrt.pop %v1523
    %v1525 = vmul.f32 %v1515, %v1524
    %v1526 = vmul.f32 %v1516, %v1524
    %v1527 = vmul.f32 %v1517, %v1524
    %v1528 = vmul.f32 %v1518, %v1524
    %v1529 = vmul.f32 %v1519, %v1524
    %v1530 = vmul.f32 %v1520, %v1524
    %v1531 = vmul.f32 %v1521, %v1524
    %v1532 = vmul.f32 %v1522, %v1524
    %s1533 = scalar_lea.vmem %s6, 5
    %v1534 = vld [vmem:[%s1533] sm:$0x1]
    %v1536 = vlaneseq
    %v1537 = vshrl.u32 %v1536, 7
    %v1538 = vsub.s32 0, %v1537
    %v1539 = vrot.slane %v1534, %v1538
    %v1541 = vadd.f32 %v1525, %v1539
    %v1542 = vadd.f32 %v1526, %v1539
    %v1543 = vadd.f32 %v1527, %v1539
    %v1544 = vadd.f32 %v1528, %v1539
    %v1545 = vadd.f32 %v1529, %v1539
    %v1546 = vadd.f32 %v1530, %v1539
    %v1547 = vadd.f32 %v1531, %v1539
    %v1548 = vadd.f32 %v1532, %v1539
    %v1549 = vpack.c.bf16 %v1542, %v1541
    %v1550 = vpack.c.bf16 %v1544, %v1543
    %v1551 = vpack.c.bf16 %v1546, %v1545
    %v1552 = vpack.c.bf16 %v1548, %v1547
    %v1553 = vlaneseq
    %v1554 = vand.u32 %v1553, 127
    %vm1555 = vcmp.lt.s32.totalorder %v1554, 16
    %v1556 = vsel %vm1555, 1, 0
    %v1557 = vcvt.s32.f32 %v1556
    %v1558 = vld [vmem:[#allocation11] sm:$0xff]
    %v1559 = vld [vmem:[#allocation11 + $0x8] sm:$0xff]
    %v1560 = vld [vmem:[#allocation11 + $0x10] sm:$0xff]
    %v1561 = vld [vmem:[#allocation11 + $0x18] sm:$0xff]
    %v1562 = vld [vmem:[#allocation11 + $0x20] sm:$0xff]
    %v1563 = vld [vmem:[#allocation11 + $0x28] sm:$0xff]
    %v1564 = vld [vmem:[#allocation11 + $0x30] sm:$0xff]
    %v1565 = vld [vmem:[#allocation11 + $0x38] sm:$0xff]
    %v1566 = vld [vmem:[#allocation11 + $0x40] sm:$0xff]
    %v1567 = vld [vmem:[#allocation11 + $0x48] sm:$0xff]
    %v1568 = vld [vmem:[#allocation11 + $0x50] sm:$0xff]
    %v1569 = vld [vmem:[#allocation11 + $0x58] sm:$0xff]
    %v1570 = vld [vmem:[#allocation11 + $0x60] sm:$0xff]
    %v1571 = vld [vmem:[#allocation11 + $0x68] sm:$0xff]
    %v1572 = vld [vmem:[#allocation11 + $0x70] sm:$0xff]
    %v1573 = vld [vmem:[#allocation11 + $0x78] sm:$0xff]
    %v1590 = vunpack.c.l.b16 %v1558
    %v1591 = vunpack.c.h.b16 %v1558
    %v1592 = vunpack.c.l.b16 %v1559
    %v1593 = vunpack.c.h.b16 %v1559
    %v1594 = vunpack.c.l.b16 %v1560
    %v1595 = vunpack.c.h.b16 %v1560
    %v1596 = vunpack.c.l.b16 %v1561
    %v1597 = vunpack.c.h.b16 %v1561
    %v1598 = vunpack.c.l.b16 %v1562
    %v1599 = vunpack.c.h.b16 %v1562
    %v1600 = vunpack.c.l.b16 %v1563
    %v1601 = vunpack.c.h.b16 %v1563
    %v1602 = vunpack.c.l.b16 %v1564
    %v1603 = vunpack.c.h.b16 %v1564
    %v1604 = vunpack.c.l.b16 %v1565
    %v1605 = vunpack.c.h.b16 %v1565
    %v1606 = vunpack.c.l.b16 %v1566
    %v1607 = vunpack.c.h.b16 %v1566
    %v1608 = vunpack.c.l.b16 %v1567
    %v1609 = vunpack.c.h.b16 %v1567
    %v1610 = vunpack.c.l.b16 %v1568
    %v1611 = vunpack.c.h.b16 %v1568
    %v1612 = vunpack.c.l.b16 %v1569
    %v1613 = vunpack.c.h.b16 %v1569
    %v1614 = vunpack.c.l.b16 %v1570
    %v1615 = vunpack.c.h.b16 %v1570
    %v1616 = vunpack.c.l.b16 %v1571
    %v1617 = vunpack.c.h.b16 %v1571
    %v1618 = vunpack.c.l.b16 %v1572
    %v1619 = vunpack.c.h.b16 %v1572
    %v1620 = vunpack.c.l.b16 %v1573
    %v1621 = vunpack.c.h.b16 %v1573
    %v1622 = vpack.c.b16 %v1592, %v1590
    %v1623 = vpack.c.b16 %v1593, %v1591
    %v1624 = vpack.c.b16 %v1596, %v1594
    %v1625 = vpack.c.b16 %v1597, %v1595
    %v1626 = vpack.c.b16 %v1600, %v1598
    %v1627 = vpack.c.b16 %v1601, %v1599
    %v1628 = vpack.c.b16 %v1604, %v1602
    %v1629 = vpack.c.b16 %v1605, %v1603
    %v1630 = vpack.c.b16 %v1608, %v1606
    %v1631 = vpack.c.b16 %v1609, %v1607
    %v1632 = vpack.c.b16 %v1612, %v1610
    %v1633 = vpack.c.b16 %v1613, %v1611
    %v1634 = vpack.c.b16 %v1616, %v1614
    %v1635 = vpack.c.b16 %v1617, %v1615
    %v1636 = vpack.c.b16 %v1620, %v1618
    %v1637 = vpack.c.b16 %v1621, %v1619
    %1654 = vmatprep.subr.bf16.mxu0 %v1623
    %1655 = vmatpush1.bf16.msra.mxu0 %v1622
    %1656 = vmatprep.subr.bf16.mxu0 %v1625
    %1657 = vmatpush1.bf16.msra.mxu0 %v1624
    %1658 = vmatprep.subr.bf16.mxu0 %v1627
    %1659 = vmatpush1.bf16.msra.mxu0 %v1626
    %1660 = vmatprep.subr.bf16.mxu0 %v1629
    %1661 = vmatpush1.bf16.msra.mxu0 %v1628
    %1662 = vmatprep.subr.bf16.mxu0 %v1631
    %1663 = vmatpush1.bf16.msra.mxu0 %v1630
    %1664 = vmatprep.subr.bf16.mxu0 %v1633
    %1665 = vmatpush1.bf16.msra.mxu0 %v1632
    %1666 = vmatprep.subr.bf16.mxu0 %v1635
    %1667 = vmatpush1.bf16.msra.mxu0 %v1634
    %1668 = vmatprep.subr.bf16.mxu0 %v1637
    %1669 = vmatpush1.bf16.msra.mxu0 %v1636
    %1670 = vmatprep.subr.bf16.mxu0 0
    %1671 = vmatpush1.bf16.msra.mxu0 0
    %1672 = vmatprep.subr.bf16.mxu0 0
    %1673 = vmatpush1.bf16.msra.mxu0 0
    %1674 = vmatprep.subr.bf16.mxu0 0
    %1675 = vmatpush1.bf16.msra.mxu0 0
    %1676 = vmatprep.subr.bf16.mxu0 0
    %1677 = vmatpush1.bf16.msra.mxu0 0
    %1678 = vmatprep.subr.bf16.mxu0 0
    %1679 = vmatpush1.bf16.msra.mxu0 0
    %1680 = vmatprep.subr.bf16.mxu0 0
    %1681 = vmatpush1.bf16.msra.mxu0 0
    %1682 = vmatprep.subr.bf16.mxu0 0
    %1683 = vmatpush1.bf16.msra.mxu0 0
    %1684 = vmatprep.subr.bf16.mxu0 0
    %1685 = vmatpush1.bf16.msra.mxu0 0
    %1686 = vmatprep.mubr.bf16.mxu0 0
    %1687 = vmatmul.mubr.bf16.gmra.mrb[0].mxu0 %v1549
    %v1688 = vpop.f32.mrb[0].mxu0
    %v1689 = vadd.f32 0.0, %v1688
    %v1690 = vpop.f32.mrb[0].mxu0
    %v1691 = vadd.f32 0.0, %v1690
    %v1692 = vpop.f32.mrb[0].mxu0
    %v1693 = vadd.f32 0.0, %v1692
    %v1694 = vpop.f32.mrb[0].mxu0
    %v1695 = vadd.f32 0.0, %v1694
    %1696 = vmatprep.mubr.bf16.mxu0 0
    %1697 = vmatmul.mubr.bf16.gmra.mrb[0].mxu0 %v1550
    %v1698 = vpop.f32.mrb[0].mxu0
    %v1699 = vadd.f32 0.0, %v1698
    %v1700 = vpop.f32.mrb[0].mxu0
    %v1701 = vadd.f32 0.0, %v1700
    %v1702 = vpop.f32.mrb[0].mxu0
    %v1703 = vadd.f32 0.0, %v1702
    %v1704 = vpop.f32.mrb[0].mxu0
    %v1705 = vadd.f32 0.0, %v1704
    %1706 = vmatprep.mubr.bf16.mxu0 0
    %1707 = vmatmul.mubr.bf16.gmra.mrb[0].mxu0 %v1551
    %v1708 = vpop.f32.mrb[0].mxu0
    %v1709 = vadd.f32 0.0, %v1708
    %v1710 = vpop.f32.mrb[0].mxu0
    %v1711 = vadd.f32 0.0, %v1710
    %v1712 = vpop.f32.mrb[0].mxu0
    %v1713 = vadd.f32 0.0, %v1712
    %v1714 = vpop.f32.mrb[0].mxu0
    %v1715 = vadd.f32 0.0, %v1714
    %1716 = vmatprep.mubr.bf16.mxu0 0
    %1717 = vmatmul.mubr.bf16.gmra.mrb[0].mxu0 %v1552
    %v1718 = vpop.f32.mrb[0].mxu0
    %v1719 = vadd.f32 0.0, %v1718
    %v1720 = vpop.f32.mrb[0].mxu0
    %v1721 = vadd.f32 0.0, %v1720
    %v1722 = vpop.f32.mrb[0].mxu0
    %v1723 = vadd.f32 0.0, %v1722
    %v1724 = vpop.f32.mrb[0].mxu0
    %v1725 = vadd.f32 0.0, %v1724
    %1726 = vdwg.mxu0
    %s1727 = scalar_lea.vmem %s6, 7
    %v1728 = vld [vmem:[%s1727] sm:$0x1]
    %v1730 = vlaneseq
    %v1731 = vshrl.u32 %v1730, 7
    %v1732 = vsub.s32 0, %v1731
    %v1733 = vrot.slane %v1728, %v1732
    %v1735 = vadd.f32 %v1689, %v1733
    %v1736 = vadd.f32 %v1693, %v1733
    %v1737 = vadd.f32 %v1699, %v1733
    %v1738 = vadd.f32 %v1703, %v1733
    %v1739 = vadd.f32 %v1709, %v1733
    %v1740 = vadd.f32 %v1713, %v1733
    %v1741 = vadd.f32 %v1719, %v1733
    %v1742 = vadd.f32 %v1723, %v1733
    %s1743 = scalar_lea.vmem %s6, 9
    %v1744 = vld [vmem:[%s1743] sm:$0x1]
    %s1745 = scalar_lea.vmem %s6, 10
    %v1746 = vld [vmem:[%s1745] sm:$0x1]
    %s1747 = scalar_lea.vmem [#allocation10], 192
    %v1748 = vld [vmem:[%s1747] sm:$0xf]
    %v1749 = vld [vmem:[%s1747 + $0x4] sm:$0xf]
    %v1750 = vld [vmem:[%s1747 + $0x8] sm:$0xf]
    %v1751 = vld [vmem:[%s1747 + $0xc] sm:$0xf]
    %v1752 = vld [vmem:[%s1747 + $0x10] sm:$0xf]
    %v1753 = vld [vmem:[%s1747 + $0x14] sm:$0xf]
    %v1754 = vld [vmem:[%s1747 + $0x18] sm:$0xf]
    %v1755 = vld [vmem:[%s1747 + $0x1c] sm:$0xf]
    %v1756 = vld [vmem:[%s1747 + $0x20] sm:$0xf]
    %v1757 = vld [vmem:[%s1747 + $0x24] sm:$0xf]
    %v1758 = vld [vmem:[%s1747 + $0x28] sm:$0xf]
    %v1759 = vld [vmem:[%s1747 + $0x2c] sm:$0xf]
    %v1760 = vld [vmem:[%s1747 + $0x30] sm:$0xf]
    %v1761 = vld [vmem:[%s1747 + $0x34] sm:$0xf]
    %v1762 = vld [vmem:[%s1747 + $0x38] sm:$0xf]
    %v1763 = vld [vmem:[%s1747 + $0x3c] sm:$0xf]
    %s1764 = scalar_lea.vmem %s6, 11
    %v1765 = vld [vmem:[%s1764] sm:$0x1]
    %v1766 = vmax.f32 %v1735, 0.0
    %v1767 = vmax.f32 %v1736, 0.0
    %v1768 = vmax.f32 %v1737, 0.0
    %v1769 = vmax.f32 %v1738, 0.0
    %v1770 = vmax.f32 %v1739, 0.0
    %v1771 = vmax.f32 %v1740, 0.0
    %v1772 = vmax.f32 %v1741, 0.0
    %v1773 = vmax.f32 %v1742, 0.0
    %1774 = vadd.xlane.f32.xlu0 %v1766
    %v1775 = vpop.xlane.xlu0 %1774
    %1776 = vadd.xlane.f32.xlu0 %v1767
    %v1777 = vpop.xlane.xlu0 %1776
    %1778 = vadd.xlane.f32.xlu0 %v1768
    %v1779 = vpop.xlane.xlu0 %1778
    %1780 = vadd.xlane.f32.xlu0 %v1769
    %v1781 = vpop.xlane.xlu0 %1780
    %1782 = vadd.xlane.f32.xlu0 %v1770
    %v1783 = vpop.xlane.xlu0 %1782
    %1784 = vadd.xlane.f32.xlu0 %v1771
    %v1785 = vpop.xlane.xlu0 %1784
    %1786 = vadd.xlane.f32.xlu0 %v1772
    %v1787 = vpop.xlane.xlu0 %1786
    %1788 = vadd.xlane.f32.xlu0 %v1773
    %v1789 = vpop.xlane.xlu0 %1788
    %v1790 = vmul.f32 %v1775, 0.0625
    %v1791 = vmul.f32 %v1777, 0.0625
    %v1792 = vmul.f32 %v1779, 0.0625
    %v1793 = vmul.f32 %v1781, 0.0625
    %v1794 = vmul.f32 %v1783, 0.0625
    %v1795 = vmul.f32 %v1785, 0.0625
    %v1796 = vmul.f32 %v1787, 0.0625
    %v1797 = vmul.f32 %v1789, 0.0625
    %v1798 = vsub.f32 %v1766, %v1790
    %v1799 = vsub.f32 %v1767, %v1791
    %v1800 = vsub.f32 %v1768, %v1792
    %v1801 = vsub.f32 %v1769, %v1793
    %v1802 = vsub.f32 %v1770, %v1794
    %v1803 = vsub.f32 %v1771, %v1795
    %v1804 = vsub.f32 %v1772, %v1796
    %v1805 = vsub.f32 %v1773, %v1797
    %v1806 = vmul.f32 %v1798, %v1557
    %v1807 = vmul.f32 %v1799, %v1557
    %v1808 = vmul.f32 %v1800, %v1557
    %v1809 = vmul.f32 %v1801, %v1557
    %v1810 = vmul.f32 %v1802, %v1557
    %v1811 = vmul.f32 %v1803, %v1557
    %v1812 = vmul.f32 %v1804, %v1557
    %v1813 = vmul.f32 %v1805, %v1557
    %v1814 = vmul.f32 %v1806, %v1806
    %v1815 = vmul.f32 %v1807, %v1807
    %v1816 = vmul.f32 %v1808, %v1808
    %v1817 = vmul.f32 %v1809, %v1809
    %v1818 = vmul.f32 %v1810, %v1810
    %v1819 = vmul.f32 %v1811, %v1811
    %v1820 = vmul.f32 %v1812, %v1812
    %v1821 = vmul.f32 %v1813, %v1813
    %1822 = vadd.xlane.f32.xlu0 %v1814
    %v1823 = vpop.xlane.xlu0 %1822
    %1824 = vadd.xlane.f32.xlu0 %v1815
    %v1825 = vpop.xlane.xlu0 %1824
    %1826 = vadd.xlane.f32.xlu0 %v1816
    %v1827 = vpop.xlane.xlu0 %1826
    %1828 = vadd.xlane.f32.xlu0 %v1817
    %v1829 = vpop.xlane.xlu0 %1828
    %1830 = vadd.xlane.f32.xlu0 %v1818
    %v1831 = vpop.xlane.xlu0 %1830
    %1832 = vadd.xlane.f32.xlu0 %v1819
    %v1833 = vpop.xlane.xlu0 %1832
    %1834 = vadd.xlane.f32.xlu0 %v1820
    %v1835 = vpop.xlane.xlu0 %1834
    %1836 = vadd.xlane.f32.xlu0 %v1821
    %v1837 = vpop.xlane.xlu0 %1836
    %v1838 = vmul.f32 %v1823, 0.0625
    %v1839 = vmul.f32 %v1825, 0.0625
    %v1840 = vmul.f32 %v1827, 0.0625
    %v1841 = vmul.f32 %v1829, 0.0625
    %v1842 = vmul.f32 %v1831, 0.0625
    %v1843 = vmul.f32 %v1833, 0.0625
    %v1844 = vmul.f32 %v1835, 0.0625
    %v1845 = vmul.f32 %v1837, 0.0625
    %v1846 = vadd.f32 %v1838, 1e-05
    %v1847 = vadd.f32 %v1839, 1e-05
    %v1848 = vadd.f32 %v1840, 1e-05
    %v1849 = vadd.f32 %v1841, 1e-05
    %v1850 = vadd.f32 %v1842, 1e-05
    %v1851 = vadd.f32 %v1843, 1e-05
    %v1852 = vadd.f32 %v1844, 1e-05
    %v1853 = vadd.f32 %v1845, 1e-05
    %v1854 = vrsqrt.pop %v1846
    %v1855 = vrsqrt.pop %v1847
    %v1856 = vrsqrt.pop %v1848
    %v1857 = vrsqrt.pop %v1849
    %v1858 = vrsqrt.pop %v1850
    %v1859 = vrsqrt.pop %v1851
    %v1860 = vrsqrt.pop %v1852
    %v1861 = vrsqrt.pop %v1853
    %v1862 = vmul.f32 %v1806, %v1854
    %v1863 = vmul.f32 %v1807, %v1855
    %v1864 = vmul.f32 %v1808, %v1856
    %v1865 = vmul.f32 %v1809, %v1857
    %v1866 = vmul.f32 %v1810, %v1858
    %v1867 = vmul.f32 %v1811, %v1859
    %v1868 = vmul.f32 %v1812, %v1860
    %v1869 = vmul.f32 %v1813, %v1861
    %v1871 = vlaneseq
    %v1872 = vshrl.u32 %v1871, 7
    %v1873 = vsub.s32 0, %v1872
    %v1874 = vrot.slane %v1744, %v1873
    %v1876 = vmul.f32 %v1862, %v1874
    %v1877 = vmul.f32 %v1863, %v1874
    %v1878 = vmul.f32 %v1864, %v1874
    %v1879 = vmul.f32 %v1865, %v1874
    %v1880 = vmul.f32 %v1866, %v1874
    %v1881 = vmul.f32 %v1867, %v1874
    %v1882 = vmul.f32 %v1868, %v1874
    %v1883 = vmul.f32 %v1869, %v1874
    %v1885 = vlaneseq
    %v1886 = vshrl.u32 %v1885, 7
    %v1887 = vsub.s32 0, %v1886
    %v1888 = vrot.slane %v1746, %v1887
    %v1890 = vadd.f32 %v1876, %v1888
    %v1891 = vadd.f32 %v1877, %v1888
    %v1892 = vadd.f32 %v1878, %v1888
    %v1893 = vadd.f32 %v1879, %v1888
    %v1894 = vadd.f32 %v1880, %v1888
    %v1895 = vadd.f32 %v1881, %v1888
    %v1896 = vadd.f32 %v1882, %v1888
    %v1897 = vadd.f32 %v1883, %v1888
    %v1898 = vpack.c.bf16 %v1891, %v1890
    %v1899 = vpack.c.bf16 %v1893, %v1892
    %v1900 = vpack.c.bf16 %v1895, %v1894
    %v1901 = vpack.c.bf16 %v1897, %v1896
    %v1903 = vlaneseq
    %v1904 = vshrl.u32 %v1903, 7
    %v1905 = vsub.s32 0, %v1904
    %v1906 = vrot.slane %v1765, %v1905
    %v1924 = vunpack.c.l.b16 %v1748
    %v1925 = vunpack.c.l.b16 %v1749
    %v1926 = vunpack.c.l.b16 %v1750
    %v1927 = vunpack.c.l.b16 %v1751
    %v1928 = vunpack.c.l.b16 %v1752
    %v1929 = vunpack.c.l.b16 %v1753
    %v1930 = vunpack.c.l.b16 %v1754
    %v1931 = vunpack.c.l.b16 %v1755
    %v1932 = vunpack.c.l.b16 %v1756
    %v1933 = vunpack.c.l.b16 %v1757
    %v1934 = vunpack.c.l.b16 %v1758
    %v1935 = vunpack.c.l.b16 %v1759
    %v1936 = vunpack.c.l.b16 %v1760
    %v1937 = vunpack.c.l.b16 %v1761
    %v1938 = vunpack.c.l.b16 %v1762
    %v1939 = vunpack.c.l.b16 %v1763
    %v1940 = vpack.c.b16 %v1925, %v1924
    %v1941 = vpack.c.b16 %v1927, %v1926
    %v1942 = vpack.c.b16 %v1929, %v1928
    %v1943 = vpack.c.b16 %v1931, %v1930
    %v1944 = vpack.c.b16 %v1933, %v1932
    %v1945 = vpack.c.b16 %v1935, %v1934
    %v1946 = vpack.c.b16 %v1937, %v1936
    %v1947 = vpack.c.b16 %v1939, %v1938
    %1956 = vmatprep.subr.bf16.mxu0 0
    %1957 = vmatpush1.bf16.msra.mxu0 %v1940
    %1958 = vmatprep.subr.bf16.mxu0 0
    %1959 = vmatpush1.bf16.msra.mxu0 %v1941
    %1960 = vmatprep.subr.bf16.mxu0 0
    %1961 = vmatpush1.bf16.msra.mxu0 %v1942
    %1962 = vmatprep.subr.bf16.mxu0 0
    %1963 = vmatpush1.bf16.msra.mxu0 %v1943
    %1964 = vmatprep.subr.bf16.mxu0 0
    %1965 = vmatpush1.bf16.msra.mxu0 %v1944
    %1966 = vmatprep.subr.bf16.mxu0 0
    %1967 = vmatpush1.bf16.msra.mxu0 %v1945
    %1968 = vmatprep.subr.bf16.mxu0 0
    %1969 = vmatpush1.bf16.msra.mxu0 %v1946
    %1970 = vmatprep.subr.bf16.mxu0 0
    %1971 = vmatpush1.bf16.msra.mxu0 %v1947
    %1972 = vmatprep.subr.bf16.mxu0 0
    %1973 = vmatpush1.bf16.msra.mxu0 0
    %1974 = vmatprep.subr.bf16.mxu0 0
    %1975 = vmatpush1.bf16.msra.mxu0 0
    %1976 = vmatprep.subr.bf16.mxu0 0
    %1977 = vmatpush1.bf16.msra.mxu0 0
    %1978 = vmatprep.subr.bf16.mxu0 0
    %1979 = vmatpush1.bf16.msra.mxu0 0
    %1980 = vmatprep.subr.bf16.mxu0 0
    %1981 = vmatpush1.bf16.msra.mxu0 0
    %1982 = vmatprep.subr.bf16.mxu0 0
    %1983 = vmatpush1.bf16.msra.mxu0 0
    %1984 = vmatprep.subr.bf16.mxu0 0
    %1985 = vmatpush1.bf16.msra.mxu0 0
    %1986 = vmatprep.subr.bf16.mxu0 0
    %1987 = vmatpush1.bf16.msra.mxu0 0
    %1988 = vmatprep.mubr.bf16.mxu0 0
    %1989 = vmatmul.mubr.bf16.gmra.mrb[0].mxu0 %v1898
    %v1990 = vpop.f32.mrb[0].mxu0
    %v1991 = vadd.f32 %v1906, %v1990
    %v1992 = vpop.f32.mrb[0].mxu0
    %v1993 = vpop.f32.mrb[0].mxu0
    %v1994 = vadd.f32 %v1906, %v1993
    %v1995 = vpop.f32.mrb[0].mxu0
    %1996 = vmatprep.mubr.bf16.mxu0 0
    %1997 = vmatmul.mubr.bf16.gmra.mrb[0].mxu0 %v1899
    %v1998 = vpop.f32.mrb[0].mxu0
    %v1999 = vadd.f32 %v1906, %v1998
    %v2000 = vpop.f32.mrb[0].mxu0
    %v2001 = vpop.f32.mrb[0].mxu0
    %v2002 = vadd.f32 %v1906, %v2001
    %v2003 = vpop.f32.mrb[0].mxu0
    %2004 = vmatprep.mubr.bf16.mxu0 0
    %2005 = vmatmul.mubr.bf16.gmra.mrb[0].mxu0 %v1900
    %v2006 = vpop.f32.mrb[0].mxu0
    %v2007 = vadd.f32 %v1906, %v2006
    %v2008 = vpop.f32.mrb[0].mxu0
    %v2009 = vpop.f32.mrb[0].mxu0
    %v2010 = vadd.f32 %v1906, %v2009
    %v2011 = vpop.f32.mrb[0].mxu0
    %2012 = vmatprep.mubr.bf16.mxu0 0
    %2013 = vmatmul.mubr.bf16.gmra.mrb[0].mxu0 %v1901
    %v2014 = vpop.f32.mrb[0].mxu0
    %v2015 = vadd.f32 %v1906, %v2014
    %v2016 = vpop.f32.mrb[0].mxu0
    %v2017 = vpop.f32.mrb[0].mxu0
    %v2018 = vadd.f32 %v1906, %v2017
    %v2019 = vpop.f32.mrb[0].mxu0
    %2020 = vdwg.mxu0
    %2021 = vst [vmem:[#allocation13] sm:$0xff] %v1991
    %2022 = vst [vmem:[#allocation13 + $0x8] sm:$0xff] %v1994
    %2023 = vst [vmem:[#allocation13 + $0x10] sm:$0xff] %v1999
    %2024 = vst [vmem:[#allocation13 + $0x18] sm:$0xff] %v2002
    %2025 = vst [vmem:[#allocation13 + $0x20] sm:$0xff] %v2007
    %2026 = vst [vmem:[#allocation13 + $0x28] sm:$0xff] %v2010
    %2027 = vst [vmem:[#allocation13 + $0x30] sm:$0xff] %v2015
    %2028 = vst [vmem:[#allocation13 + $0x38] sm:$0xff] %v2018
    %v2029 = vpack.c.bf16 %v1994, %v1991
    %v2030 = vpack.c.bf16 %v2002, %v1999
    %v2031 = vpack.c.bf16 %v2010, %v2007
    %v2032 = vpack.c.bf16 %v2018, %v2015
    %s2033 = scalar_lea.vmem [#allocation10], 128
    %v2034 = vld [vmem:[%s2033] sm:$0xf]
    %v2035 = vld [vmem:[%s2033 + $0x4] sm:$0xf]
    %v2036 = vld [vmem:[%s2033 + $0x8] sm:$0xf]
    %v2037 = vld [vmem:[%s2033 + $0xc] sm:$0xf]
    %v2038 = vld [vmem:[%s2033 + $0x10] sm:$0xf]
    %v2039 = vld [vmem:[%s2033 + $0x14] sm:$0xf]
    %v2040 = vld [vmem:[%s2033 + $0x18] sm:$0xf]
    %v2041 = vld [vmem:[%s2033 + $0x1c] sm:$0xf]
    %v2042 = vld [vmem:[%s2033 + $0x20] sm:$0xf]
    %v2043 = vld [vmem:[%s2033 + $0x24] sm:$0xf]
    %v2044 = vld [vmem:[%s2033 + $0x28] sm:$0xf]
    %v2045 = vld [vmem:[%s2033 + $0x2c] sm:$0xf]
    %v2046 = vld [vmem:[%s2033 + $0x30] sm:$0xf]
    %v2047 = vld [vmem:[%s2033 + $0x34] sm:$0xf]
    %v2048 = vld [vmem:[%s2033 + $0x38] sm:$0xf]
    %v2049 = vld [vmem:[%s2033 + $0x3c] sm:$0xf]
    %v2066 = vunpack.c.l.b16 %v2034
    %v2067 = vunpack.c.l.b16 %v2035
    %v2068 = vunpack.c.l.b16 %v2036
    %v2069 = vunpack.c.l.b16 %v2037
    %v2070 = vunpack.c.l.b16 %v2038
    %v2071 = vunpack.c.l.b16 %v2039
    %v2072 = vunpack.c.l.b16 %v2040
    %v2073 = vunpack.c.l.b16 %v2041
    %v2074 = vunpack.c.l.b16 %v2042
    %v2075 = vunpack.c.l.b16 %v2043
    %v2076 = vunpack.c.l.b16 %v2044
    %v2077 = vunpack.c.l.b16 %v2045
    %v2078 = vunpack.c.l.b16 %v2046
    %v2079 = vunpack.c.l.b16 %v2047
    %v2080 = vunpack.c.l.b16 %v2048
    %v2081 = vunpack.c.l.b16 %v2049
    %v2082 = vpack.c.b16 %v2067, %v2066
    %v2083 = vpack.c.b16 %v2069, %v2068
    %v2084 = vpack.c.b16 %v2071, %v2070
    %v2085 = vpack.c.b16 %v2073, %v2072
    %v2086 = vpack.c.b16 %v2075, %v2074
    %v2087 = vpack.c.b16 %v2077, %v2076
    %v2088 = vpack.c.b16 %v2079, %v2078
    %v2089 = vpack.c.b16 %v2081, %v2080
    %2098 = vmatprep.subr.bf16.mxu0 0
    %2099 = vmatpush1.bf16.msra.mxu0 %v2082
    %2100 = vmatprep.subr.bf16.mxu0 0
    %2101 = vmatpush1.bf16.msra.mxu0 %v2083
    %2102 = vmatprep.subr.bf16.mxu0 0
    %2103 = vmatpush1.bf16.msra.mxu0 %v2084
    %2104 = vmatprep.subr.bf16.mxu0 0
    %2105 = vmatpush1.bf16.msra.mxu0 %v2085
    %2106 = vmatprep.subr.bf16.mxu0 0
    %2107 = vmatpush1.bf16.msra.mxu0 %v2086
    %2108 = vmatprep.subr.bf16.mxu0 0
    %2109 = vmatpush1.bf16.msra.mxu0 %v2087
    %2110 = vmatprep.subr.bf16.mxu0 0
    %2111 = vmatpush1.bf16.msra.mxu0 %v2088
    %2112 = vmatprep.subr.bf16.mxu0 0
    %2113 = vmatpush1.bf16.msra.mxu0 %v2089
    %2114 = vmatprep.subr.bf16.mxu0 0
    %2115 = vmatpush1.bf16.msra.mxu0 0
    %2116 = vmatprep.subr.bf16.mxu0 0
    %2117 = vmatpush1.bf16.msra.mxu0 0
    %2118 = vmatprep.subr.bf16.mxu0 0
    %2119 = vmatpush1.bf16.msra.mxu0 0
    %2120 = vmatprep.subr.bf16.mxu0 0
    %2121 = vmatpush1.bf16.msra.mxu0 0
    %2122 = vmatprep.subr.bf16.mxu0 0
    %2123 = vmatpush1.bf16.msra.mxu0 0
    %2124 = vmatprep.subr.bf16.mxu0 0
    %2125 = vmatpush1.bf16.msra.mxu0 0
    %2126 = vmatprep.subr.bf16.mxu0 0
    %2127 = vmatpush1.bf16.msra.mxu0 0
    %2128 = vmatprep.subr.bf16.mxu0 0
    %2129 = vmatpush1.bf16.msra.mxu0 0
    %2130 = vmatprep.mubr.bf16.mxu0 0
    %2131 = vmatmul.mubr.bf16.gmra.mrb[0].mxu0 %v2029
    %v2132 = vpop.f32.mrb[0].mxu0
    %v2133 = vadd.f32 0.0, %v2132
    %v2134 = vpop.f32.mrb[0].mxu0
    %v2135 = vpop.f32.mrb[0].mxu0
    %v2136 = vadd.f32 0.0, %v2135
    %v2137 = vpop.f32.mrb[0].mxu0
    %2138 = vmatprep.mubr.bf16.mxu0 0
    %2139 = vmatmul.mubr.bf16.gmra.mrb[0].mxu0 %v2030
    %v2140 = vpop.f32.mrb[0].mxu0
    %v2141 = vadd.f32 0.0, %v2140
    %v2142 = vpop.f32.mrb[0].mxu0
    %v2143 = vpop.f32.mrb[0].mxu0
    %v2144 = vadd.f32 0.0, %v2143
    %v2145 = vpop.f32.mrb[0].mxu0
    %2146 = vmatprep.mubr.bf16.mxu0 0
    %2147 = vmatmul.mubr.bf16.gmra.mrb[0].mxu0 %v2031
    %v2148 = vpop.f32.mrb[0].mxu0
    %v2149 = vadd.f32 0.0, %v2148
    %v2150 = vpop.f32.mrb[0].mxu0
    %v2151 = vpop.f32.mrb[0].mxu0
    %v2152 = vadd.f32 0.0, %v2151
    %v2153 = vpop.f32.mrb[0].mxu0
    %2154 = vmatprep.mubr.bf16.mxu0 0
    %2155 = vmatmul.mubr.bf16.gmra.mrb[0].mxu0 %v2032
    %v2156 = vpop.f32.mrb[0].mxu0
    %v2157 = vadd.f32 0.0, %v2156
    %v2158 = vpop.f32.mrb[0].mxu0
    %v2159 = vpop.f32.mrb[0].mxu0
    %v2160 = vadd.f32 0.0, %v2159
    %v2161 = vpop.f32.mrb[0].mxu0
    %2162 = vdwg.mxu0
    %v2163 = vadd.f32 %v1691, %v2133
    %v2164 = vadd.f32 %v1695, %v2136
    %v2165 = vadd.f32 %v1701, %v2141
    %v2166 = vadd.f32 %v1705, %v2144
    %v2167 = vadd.f32 %v1711, %v2149
    %v2168 = vadd.f32 %v1715, %v2152
    %v2169 = vadd.f32 %v1721, %v2157
    %v2170 = vadd.f32 %v1725, %v2160
    %s2171 = scalar_lea.vmem %s6, 8
    %v2172 = vld [vmem:[%s2171] sm:$0x1]
    %v2174 = vlaneseq
    %v2175 = vshrl.u32 %v2174, 7
    %v2176 = vsub.s32 0, %v2175
    %v2177 = vrot.slane %v2172, %v2176
    %v2179 = vadd.f32 %v2163, %v2177
    %v2180 = vadd.f32 %v2164, %v2177
    %v2181 = vadd.f32 %v2165, %v2177
    %v2182 = vadd.f32 %v2166, %v2177
    %v2183 = vadd.f32 %v2167, %v2177
    %v2184 = vadd.f32 %v2168, %v2177
    %v2185 = vadd.f32 %v2169, %v2177
    %v2186 = vadd.f32 %v2170, %v2177
    %s2187 = scalar_lea.vmem %s6, 12
    %v2188 = vld [vmem:[%s2187] sm:$0x1]
    %s2189 = scalar_lea.vmem %s6, 13
    %v2190 = vld [vmem:[%s2189] sm:$0x1]
    %s2191 = scalar_lea.vmem [#allocation10], 256
    %v2192 = vld [vmem:[%s2191] sm:$0xf]
    %v2193 = vld [vmem:[%s2191 + $0x4] sm:$0xf]
    %v2194 = vld [vmem:[%s2191 + $0x8] sm:$0xf]
    %v2195 = vld [vmem:[%s2191 + $0xc] sm:$0xf]
    %v2196 = vld [vmem:[%s2191 + $0x10] sm:$0xf]
    %v2197 = vld [vmem:[%s2191 + $0x14] sm:$0xf]
    %v2198 = vld [vmem:[%s2191 + $0x18] sm:$0xf]
    %v2199 = vld [vmem:[%s2191 + $0x1c] sm:$0xf]
    %v2200 = vld [vmem:[%s2191 + $0x20] sm:$0xf]
    %v2201 = vld [vmem:[%s2191 + $0x24] sm:$0xf]
    %v2202 = vld [vmem:[%s2191 + $0x28] sm:$0xf]
    %v2203 = vld [vmem:[%s2191 + $0x2c] sm:$0xf]
    %v2204 = vld [vmem:[%s2191 + $0x30] sm:$0xf]
    %v2205 = vld [vmem:[%s2191 + $0x34] sm:$0xf]
    %v2206 = vld [vmem:[%s2191 + $0x38] sm:$0xf]
    %v2207 = vld [vmem:[%s2191 + $0x3c] sm:$0xf]
    %s2208 = scalar_lea.vmem %s6, 14
    %v2209 = vld [vmem:[%s2208] sm:$0x1]
    %v2210 = vmax.f32 %v2179, 0.0
    %v2211 = vmax.f32 %v2180, 0.0
    %v2212 = vmax.f32 %v2181, 0.0
    %v2213 = vmax.f32 %v2182, 0.0
    %v2214 = vmax.f32 %v2183, 0.0
    %v2215 = vmax.f32 %v2184, 0.0
    %v2216 = vmax.f32 %v2185, 0.0
    %v2217 = vmax.f32 %v2186, 0.0
    %2218 = vadd.xlane.f32.xlu0 %v2210
    %v2219 = vpop.xlane.xlu0 %2218
    %2220 = vadd.xlane.f32.xlu0 %v2211
    %v2221 = vpop.xlane.xlu0 %2220
    %2222 = vadd.xlane.f32.xlu0 %v2212
    %v2223 = vpop.xlane.xlu0 %2222
    %2224 = vadd.xlane.f32.xlu0 %v2213
    %v2225 = vpop.xlane.xlu0 %2224
    %2226 = vadd.xlane.f32.xlu0 %v2214
    %v2227 = vpop.xlane.xlu0 %2226
    %2228 = vadd.xlane.f32.xlu0 %v2215
    %v2229 = vpop.xlane.xlu0 %2228
    %2230 = vadd.xlane.f32.xlu0 %v2216
    %v2231 = vpop.xlane.xlu0 %2230
    %2232 = vadd.xlane.f32.xlu0 %v2217
    %v2233 = vpop.xlane.xlu0 %2232
    %v2234 = vmul.f32 %v2219, 0.0625
    %v2235 = vmul.f32 %v2221, 0.0625
    %v2236 = vmul.f32 %v2223, 0.0625
    %v2237 = vmul.f32 %v2225, 0.0625
    %v2238 = vmul.f32 %v2227, 0.0625
    %v2239 = vmul.f32 %v2229, 0.0625
    %v2240 = vmul.f32 %v2231, 0.0625
    %v2241 = vmul.f32 %v2233, 0.0625
    %v2242 = vsub.f32 %v2210, %v2234
    %v2243 = vsub.f32 %v2211, %v2235
    %v2244 = vsub.f32 %v2212, %v2236
    %v2245 = vsub.f32 %v2213, %v2237
    %v2246 = vsub.f32 %v2214, %v2238
    %v2247 = vsub.f32 %v2215, %v2239
    %v2248 = vsub.f32 %v2216, %v2240
    %v2249 = vsub.f32 %v2217, %v2241
    %v2250 = vmul.f32 %v2242, %v1557
    %v2251 = vmul.f32 %v2243, %v1557
    %v2252 = vmul.f32 %v2244, %v1557
    %v2253 = vmul.f32 %v2245, %v1557
    %v2254 = vmul.f32 %v2246, %v1557
    %v2255 = vmul.f32 %v2247, %v1557
    %v2256 = vmul.f32 %v2248, %v1557
    %v2257 = vmul.f32 %v2249, %v1557
    %v2258 = vmul.f32 %v2250, %v2250
    %v2259 = vmul.f32 %v2251, %v2251
    %v2260 = vmul.f32 %v2252, %v2252
    %v2261 = vmul.f32 %v2253, %v2253
    %v2262 = vmul.f32 %v2254, %v2254
    %v2263 = vmul.f32 %v2255, %v2255
    %v2264 = vmul.f32 %v2256, %v2256
    %v2265 = vmul.f32 %v2257, %v2257
    %2266 = vadd.xlane.f32.xlu0 %v2258
    %v2267 = vpop.xlane.xlu0 %2266
    %2268 = vadd.xlane.f32.xlu0 %v2259
    %v2269 = vpop.xlane.xlu0 %2268
    %2270 = vadd.xlane.f32.xlu0 %v2260
    %v2271 = vpop.xlane.xlu0 %2270
    %2272 = vadd.xlane.f32.xlu0 %v2261
    %v2273 = vpop.xlane.xlu0 %2272
    %2274 = vadd.xlane.f32.xlu0 %v2262
    %v2275 = vpop.xlane.xlu0 %2274
    %2276 = vadd.xlane.f32.xlu0 %v2263
    %v2277 = vpop.xlane.xlu0 %2276
    %2278 = vadd.xlane.f32.xlu0 %v2264
    %v2279 = vpop.xlane.xlu0 %2278
    %2280 = vadd.xlane.f32.xlu0 %v2265
    %v2281 = vpop.xlane.xlu0 %2280
    %v2282 = vmul.f32 %v2267, 0.0625
    %v2283 = vmul.f32 %v2269, 0.0625
    %v2284 = vmul.f32 %v2271, 0.0625
    %v2285 = vmul.f32 %v2273, 0.0625
    %v2286 = vmul.f32 %v2275, 0.0625
    %v2287 = vmul.f32 %v2277, 0.0625
    %v2288 = vmul.f32 %v2279, 0.0625
    %v2289 = vmul.f32 %v2281, 0.0625
    %v2290 = vadd.f32 %v2282, 1e-05
    %v2291 = vadd.f32 %v2283, 1e-05
    %v2292 = vadd.f32 %v2284, 1e-05
    %v2293 = vadd.f32 %v2285, 1e-05
    %v2294 = vadd.f32 %v2286, 1e-05
    %v2295 = vadd.f32 %v2287, 1e-05
    %v2296 = vadd.f32 %v2288, 1e-05
    %v2297 = vadd.f32 %v2289, 1e-05
    %v2298 = vrsqrt.pop %v2290
    %v2299 = vrsqrt.pop %v2291
    %v2300 = vrsqrt.pop %v2292
    %v2301 = vrsqrt.pop %v2293
    %v2302 = vrsqrt.pop %v2294
    %v2303 = vrsqrt.pop %v2295
    %v2304 = vrsqrt.pop %v2296
    %v2305 = vrsqrt.pop %v2297
    %v2306 = vmul.f32 %v2250, %v2298
    %v2307 = vmul.f32 %v2251, %v2299
    %v2308 = vmul.f32 %v2252, %v2300
    %v2309 = vmul.f32 %v2253, %v2301
    %v2310 = vmul.f32 %v2254, %v2302
    %v2311 = vmul.f32 %v2255, %v2303
    %v2312 = vmul.f32 %v2256, %v2304
    %v2313 = vmul.f32 %v2257, %v2305
    %v2315 = vlaneseq
    %v2316 = vshrl.u32 %v2315, 7
    %v2317 = vsub.s32 0, %v2316
    %v2318 = vrot.slane %v2188, %v2317
    %v2320 = vmul.f32 %v2306, %v2318
    %v2321 = vmul.f32 %v2307, %v2318
    %v2322 = vmul.f32 %v2308, %v2318
    %v2323 = vmul.f32 %v2309, %v2318
    %v2324 = vmul.f32 %v2310, %v2318
    %v2325 = vmul.f32 %v2311, %v2318
    %v2326 = vmul.f32 %v2312, %v2318
    %v2327 = vmul.f32 %v2313, %v2318
    %v2329 = vlaneseq
    %v2330 = vshrl.u32 %v2329, 7
    %v2331 = vsub.s32 0, %v2330
    %v2332 = vrot.slane %v2190, %v2331
    %v2334 = vadd.f32 %v2320, %v2332
    %v2335 = vadd.f32 %v2321, %v2332
    %v2336 = vadd.f32 %v2322, %v2332
    %v2337 = vadd.f32 %v2323, %v2332
    %v2338 = vadd.f32 %v2324, %v2332
    %v2339 = vadd.f32 %v2325, %v2332
    %v2340 = vadd.f32 %v2326, %v2332
    %v2341 = vadd.f32 %v2327, %v2332
    %v2342 = vpack.c.bf16 %v2335, %v2334
    %v2343 = vpack.c.bf16 %v2337, %v2336
    %v2344 = vpack.c.bf16 %v2339, %v2338
    %v2345 = vpack.c.bf16 %v2341, %v2340
    %v2347 = vlaneseq
    %v2348 = vshrl.u32 %v2347, 7
    %v2349 = vsub.s32 0, %v2348
    %v2350 = vrot.slane %v2209, %v2349
    %v2368 = vunpack.c.l.b16 %v2192
    %v2369 = vunpack.c.l.b16 %v2193
    %v2370 = vunpack.c.l.b16 %v2194
    %v2371 = vunpack.c.l.b16 %v2195
    %v2372 = vunpack.c.l.b16 %v2196
    %v2373 = vunpack.c.l.b16 %v2197
    %v2374 = vunpack.c.l.b16 %v2198
    %v2375 = vunpack.c.l.b16 %v2199
    %v2376 = vunpack.c.l.b16 %v2200
    %v2377 = vunpack.c.l.b16 %v2201
    %v2378 = vunpack.c.l.b16 %v2202
    %v2379 = vunpack.c.l.b16 %v2203
    %v2380 = vunpack.c.l.b16 %v2204
    %v2381 = vunpack.c.l.b16 %v2205
    %v2382 = vunpack.c.l.b16 %v2206
    %v2383 = vunpack.c.l.b16 %v2207
    %v2384 = vpack.c.b16 %v2369, %v2368
    %v2385 = vpack.c.b16 %v2371, %v2370
    %v2386 = vpack.c.b16 %v2373, %v2372
    %v2387 = vpack.c.b16 %v2375, %v2374
    %v2388 = vpack.c.b16 %v2377, %v2376
    %v2389 = vpack.c.b16 %v2379, %v2378
    %v2390 = vpack.c.b16 %v2381, %v2380
    %v2391 = vpack.c.b16 %v2383, %v2382
    %2400 = vmatprep.subr.bf16.mxu0 0
    %2401 = vmatpush1.bf16.msra.mxu0 %v2384
    %2402 = vmatprep.subr.bf16.mxu0 0
    %2403 = vmatpush1.bf16.msra.mxu0 %v2385
    %2404 = vmatprep.subr.bf16.mxu0 0
    %2405 = vmatpush1.bf16.msra.mxu0 %v2386
    %2406 = vmatprep.subr.bf16.mxu0 0
    %2407 = vmatpush1.bf16.msra.mxu0 %v2387
    %2408 = vmatprep.subr.bf16.mxu0 0
    %2409 = vmatpush1.bf16.msra.mxu0 %v2388
    %2410 = vmatprep.subr.bf16.mxu0 0
    %2411 = vmatpush1.bf16.msra.mxu0 %v2389
    %2412 = vmatprep.subr.bf16.mxu0 0
    %2413 = vmatpush1.bf16.msra.mxu0 %v2390
    %2414 = vmatprep.subr.bf16.mxu0 0
    %2415 = vmatpush1.bf16.msra.mxu0 %v2391
    %2416 = vmatprep.subr.bf16.mxu0 0
    %2417 = vmatpush1.bf16.msra.mxu0 0
    %2418 = vmatprep.subr.bf16.mxu0 0
    %2419 = vmatpush1.bf16.msra.mxu0 0
    %2420 = vmatprep.subr.bf16.mxu0 0
    %2421 = vmatpush1.bf16.msra.mxu0 0
    %2422 = vmatprep.subr.bf16.mxu0 0
    %2423 = vmatpush1.bf16.msra.mxu0 0
    %2424 = vmatprep.subr.bf16.mxu0 0
    %2425 = vmatpush1.bf16.msra.mxu0 0
    %2426 = vmatprep.subr.bf16.mxu0 0
    %2427 = vmatpush1.bf16.msra.mxu0 0
    %2428 = vmatprep.subr.bf16.mxu0 0
    %2429 = vmatpush1.bf16.msra.mxu0 0
    %2430 = vmatprep.subr.bf16.mxu0 0
    %2431 = vmatpush1.bf16.msra.mxu0 0
    %2432 = vmatprep.mubr.bf16.mxu0 0
    %2433 = vmatmul.mubr.bf16.gmra.mrb[0].mxu0 %v2342
    %v2434 = vpop.f32.mrb[0].mxu0
    %v2435 = vadd.f32 %v2350, %v2434
    %v2436 = vpop.f32.mrb[0].mxu0
    %v2437 = vpop.f32.mrb[0].mxu0
    %v2438 = vadd.f32 %v2350, %v2437
    %v2439 = vpop.f32.mrb[0].mxu0
    %2440 = vmatprep.mubr.bf16.mxu0 0
    %2441 = vmatmul.mubr.bf16.gmra.mrb[0].mxu0 %v2343
    %v2442 = vpop.f32.mrb[0].mxu0
    %v2443 = vadd.f32 %v2350, %v2442
    %v2444 = vpop.f32.mrb[0].mxu0
    %v2445 = vpop.f32.mrb[0].mxu0
    %v2446 = vadd.f32 %v2350, %v2445
    %v2447 = vpop.f32.mrb[0].mxu0
    %2448 = vmatprep.mubr.bf16.mxu0 0
    %2449 = vmatmul.mubr.bf16.gmra.mrb[0].mxu0 %v2344
    %v2450 = vpop.f32.mrb[0].mxu0
    %v2451 = vadd.f32 %v2350, %v2450
    %v2452 = vpop.f32.mrb[0].mxu0
    %v2453 = vpop.f32.mrb[0].mxu0
    %v2454 = vadd.f32 %v2350, %v2453
    %v2455 = vpop.f32.mrb[0].mxu0
    %2456 = vmatprep.mubr.bf16.mxu0 0
    %2457 = vmatmul.mubr.bf16.gmra.mrb[0].mxu0 %v2345
    %v2458 = vpop.f32.mrb[0].mxu0
    %v2459 = vadd.f32 %v2350, %v2458
    %v2460 = vpop.f32.mrb[0].mxu0
    %v2461 = vpop.f32.mrb[0].mxu0
    %v2462 = vadd.f32 %v2350, %v2461
    %v2463 = vpop.f32.mrb[0].mxu0
    %2464 = vdwg.mxu0
    %2465 = vst [vmem:[#allocation14] sm:$0xff] %v2435
    %2466 = vst [vmem:[#allocation14 + $0x8] sm:$0xff] %v2438
    %2467 = vst [vmem:[#allocation14 + $0x10] sm:$0xff] %v2443
    %2468 = vst [vmem:[#allocation14 + $0x18] sm:$0xff] %v2446
    %2469 = vst [vmem:[#allocation14 + $0x20] sm:$0xff] %v2451
    %2470 = vst [vmem:[#allocation14 + $0x28] sm:$0xff] %v2454
    %2471 = vst [vmem:[#allocation14 + $0x30] sm:$0xff] %v2459
    %2472 = vst [vmem:[#allocation14 + $0x38] sm:$0xff] %v2462
    // Predicated region
    $region54: #{tpu_custom_call.1} parent=1 // pred_check
      _
    $region55: #{tpu_custom_call.1} parent=1 // pred_check_branch
      %2474 = sbr.rel (0) target = $region57
    $region56: #{tpu_custom_call.1} parent=1 // pred_region
      %s2476 = ssub.s32 1024, 1024
      %2477 = vsyncadd [#allocation4], %s2476
      %s2478 = sshll.u32 [#allocation13], 4
      %s2479 = int_to_ptr.vmem [resolvable:$true] %s2478
      %2484 = dma.vmem_to_hbm [thread:$0]  %s2479, 1024, %s7, [#allocation4], 128, 128, 8
    $region57: #{tpu_custom_call.1} parent=1 // pred_fallthru
      _
    // Predicated region
    $region58: #{tpu_custom_call.1} parent=1 // pred_check
      _
    $region59: #{tpu_custom_call.1} parent=1 // pred_check_branch
      %2486 = sbr.rel (0) target = $region61
    $region60: #{tpu_custom_call.1} parent=1 // pred_region
      %s2488 = ssub.s32 1024, 1024
      %2489 = vsyncadd [#allocation15], %s2488
      %s2490 = sshll.u32 [#allocation14], 4
      %s2491 = int_to_ptr.vmem [resolvable:$true] %s2490
      %2496 = dma.vmem_to_hbm [thread:$0]  %s2491, 1024, %s8, [#allocation15], 128, 128, 8
    $region61: #{tpu_custom_call.1} parent=1 // pred_fallthru
      _
    // Predicated region
    $region62: #{tpu_custom_call.1} parent=1 // pred_check
      _
    $region63: #{tpu_custom_call.1} parent=1 // pred_check_branch
      %2498 = sbr.rel (0) target = $region65
    $region64: #{tpu_custom_call.1} parent=1 // pred_region
      %2499 = dma.done [#allocation4], 1024
    $region65: #{tpu_custom_call.1} parent=1 // pred_fallthru
      _
    // Predicated region
    $region66: #{tpu_custom_call.1} parent=1 // pred_check
      _
    $region67: #{tpu_custom_call.1} parent=1 // pred_check_branch
      %2501 = sbr.rel (0) target = $region69
    $region68: #{tpu_custom_call.1} parent=1 // pred_region
      %2502 = dma.done [#allocation15], 1024
    $region69: #{tpu_custom_call.1} parent=1 // pred_fallthru
      _
    %2503 = vsyncpa [#allocation3], 1
    %2504 = vsyncpa [#allocation6], 1
    %2505 = vsyncpa [#allocation9], 1
    %2506 = vsyncpa [#allocation12], 1
    %2507 = vsyncpa [#allocation4], 1
    %2508 = vsyncpa [#allocation15], 1

</llo_original>
